<compile_context>
chip_gen: v6e
topology: v6e:2x2x1
jax: 0.10.0
libtpu: 0.0.40
codegen_flags: <defaults>
</compile_context>

<pallas_src>
import numpy as np
import jax
import jax.numpy as jnp
from jax.experimental import pallas as pl
from jax.experimental.pallas import tpu as pltpu


N_SEQ = 128   # sequence length (DCT size)
N_CH = 4      # input channels
H_FFN1 = 8    # ffn1 hidden width
H_FFN2 = 256  # ffn2 hidden width


# ----------------------------- Pallas kernel --------------------------------
def dct_lowrank_kernel(
    x_ref,    # (TB, 512)   f32   TB batch rows, (channel,seq) flattened on lanes
    e_ref,    # (512, 1024) bf16  kron-folded DCT/128 x W1
    bw_ref,   # (2, 1024)   f32   row0: b1[h] bcast over n, row1: W2[h] bcast over n
    m1_ref,   # (128, 256)  bf16  fused LowRank(128,256): A1 @ B1
    fc2_ref,  # (3, 256)    f32   row0: c1' = c1 + b2*colsum(M1), row1: m2, row2: c2
    out_ref,  # (1, TB)     f32   lane-dense per-batch scalars
):
    f32, bf16 = jnp.float32, jnp.bfloat16
    tb = x_ref.shape[0]

    # DCT + Linear(4,8) fused into one well-shaped MXU matmul via the kron fold.
    x = x_ref[...].astype(bf16)                                    # (TB, 512)
    h1 = jnp.dot(x, e_ref[...], preferred_element_type=f32)        # (TB, 1024)

    # + b1[h], ReLU, * W2[h]  (bias / weight pre-broadcast across 128 lanes each).
    h1 = jnp.maximum(h1 + bw_ref[0:1, :], 0.0) * bw_ref[1:2, :]

    # Linear(8,1): sum over the 8 hidden channels via static 128-lane slices (VPU).
    h2 = h1[:, 0:N_SEQ]
    for h in range(1, H_FFN1):
        h2 = h2 + h1[:, h * N_SEQ:(h + 1) * N_SEQ]                 # (TB, 128)

    # ffn2: LowRank(128,256) (factors pre-multiplied, ffn1's b2 folded into c1').
    u = jnp.dot(h2.astype(bf16), m1_ref[...], preferred_element_type=f32)
    u = jnp.maximum(u + fc2_ref[0:1, :], 0.0)                      # (TB, 256)

    # LowRank(256,1): lane multiply + reduce in f32 (VPU/XLU), + c2.
    v = jnp.sum(u * fc2_ref[1:2, :], axis=-1, keepdims=True)       # (TB, 1)
    v = v + fc2_ref[2:3, 0:1]

    # Lane-dense store: one (1, TB) row of per-batch scalars per grid step.
    out_ref[...] = v.reshape(1, tb)


# ------------------------------ constants / prep -----------------------------
def dct_matrix(n):
    # Un-normalized DCT-II: D[i, k] = 2 * cos(pi * (2i+1) * k / (2n))
    i = np.arange(n)[:, None].astype(np.float64)
    k = np.arange(n)[None, :].astype(np.float64)
    return jnp.asarray(2.0 * np.cos(np.pi * (2.0 * i + 1.0) * k / (2.0 * n)),
                       dtype=jnp.float32)


def prepare_params(params):
    """One-time constant folding. Run at init, NOT per forward call."""
    d = dct_matrix(N_SEQ) / N_SEQ                       # fold the 1/N scale
    # Kron fold: E[(c*128+m),(h*128+n)] = W1[c,h] * D[m,n] / 128
    e = jnp.kron(params["W1"], d)                       # (512, 1024)

    b1_full = jnp.repeat(params["b1"], N_SEQ)           # (1024,)  b1[h] per n-block
    w2_full = jnp.repeat(params["W2"][:, 0], N_SEQ)     # (1024,)  W2[h] per n-block
    bw = jnp.stack([b1_full, w2_full], axis=0)          # (2, 1024)

    m1 = params["A1"] @ params["B1"]                    # (128, 256)
    m2 = (params["A2"] @ params["B2"])[:, 0]            # (256,)
    # Fold ffn1's second bias b2 into c1: (h + b2) @ M1 = h @ M1 + b2*colsum(M1)
    c1p = params["c1"] + params["b2"][0] * jnp.sum(m1, axis=0)
    c2_row = jnp.broadcast_to(params["c2"], (H_FFN2,))
    fc2 = jnp.stack([c1p, m2, c2_row], axis=0)          # (3, 256)

    return {
        "e":   e.astype(jnp.bfloat16),                  # (512, 1024)
        "bw":  bw.astype(jnp.float32),                  # (2, 1024)
        "m1":  m1.astype(jnp.bfloat16),                 # (128, 256)
        "fc2": fc2.astype(jnp.float32),                 # (3, 256)
    }


# ------------------------------ JAX wrapper ----------------------------------
def _choose_tb(B, tb_max=128):
    """Batch-tile size: >=4 grid steps when possible (v7x megacore + pipelining),
    a multiple of 8 sublanes, capped at tb_max rows."""
    if B <= 16:
        return B
    tb = min(tb_max, -(-B // 4))
    tb = max(8, -(-tb // 8) * 8)
    return min(tb, B)


def model_forward(x, prep):
    """x: (B, 4, 128) float32 (NCL like the PyTorch module). Returns (B, 1)."""
    B, C, N = x.shape
    assert C == N_CH and N == N_SEQ

    TB = _choose_tb(B)
    n_steps = -(-B // TB)
    B_pad = n_steps * TB

    xf = x.reshape(B, C * N)                            # wrapper-side flatten (free)
    if B_pad != B:
        xf = jnp.pad(xf, ((0, B_pad - B), (0, 0)))

    def const(shape):
        return pl.BlockSpec(shape, lambda i: (0,) * len(shape))

    out = pl.pallas_call(
        dct_lowrank_kernel,
        out_shape=jax.ShapeDtypeStruct((n_steps, TB), jnp.float32),
        grid=(n_steps,),
        in_specs=[
            pl.BlockSpec((TB, C * N), lambda i: (i, 0)),   # x: TB batches per step
            const((C * N, H_FFN1 * N_SEQ)),                # e
            const((2, H_FFN1 * N_SEQ)),                    # bw
            const((N_SEQ, H_FFN2)),                        # m1
            const((3, H_FFN2)),                            # fc2
        ],
        out_specs=pl.BlockSpec((1, TB), lambda i: (i, 0)),
        compiler_params=pltpu.CompilerParams(
            dimension_semantics=("parallel",)),            # megacore on v7x
    )(xf, prep["e"], prep["bw"], prep["m1"], prep["fc2"])

    return out.reshape(B_pad, 1)[:B]                       # (B, 1)


# --------------------------- references (pure JAX) ----------------------------
def model_forward_ref(x, params):
    """f32 reference matching the PyTorch module's math."""
    B, C, N = x.shape
    D = dct_matrix(N)
    y = (x @ D) / N                                       # (B, C, N)
    t = jnp.transpose(y, (0, 2, 1))                       # (B, N, C)
    t = jnp.maximum(t @ params["W1"] + params["b1"], 0.0)
    t = t @ params["W2"] + params["b2"]                   # (B, N, 1)
    t = jnp.transpose(t, (0, 2, 1))                       # (B, 1, N)
    t = jnp.maximum(t @ params["A1"] @ params["B1"] + params["c1"], 0.0)
    t = t @ params["A2"] @ params["B2"] + params["c2"]    # (B, 1, 1)
    return t[..., 0]                                      # (B, 1)


def model_forward_matched(x, prep):
    """Pure-JAX replica of the kernel's exact math/precision (bf16 MXU, f32 acc)."""
    f32, bf16 = jnp.float32, jnp.bfloat16
    B = x.shape[0]
    xf = x.reshape(B, N_CH * N_SEQ).astype(bf16)
    h1 = jnp.dot(xf, prep["e"], preferred_element_type=f32)
    h1 = jnp.maximum(h1 + prep["bw"][0:1, :], 0.0) * prep["bw"][1:2, :]
    h2 = h1.reshape(B, H_FFN1, N_SEQ).sum(axis=1)
    u = jnp.dot(h2.astype(bf16), prep["m1"], preferred_element_type=f32)
    u = jnp.maximum(u + prep["fc2"][0:1, :], 0.0)
    v = jnp.sum(u * prep["fc2"][1:2, :], axis=-1, keepdims=True)
    return v + prep["fc2"][2:3, 0:1]                      # (B, 1)


# --------------------------------- params -------------------------------------
def init_params(key):
    ks = jax.random.split(key, 10)

    def kaiming(k, shape, fan_in):
        bound = float(np.sqrt(6.0 / fan_in))
        return jax.random.uniform(k, shape, jnp.float32, -bound, bound)

    return {
        # ffn1: Linear(4,8), Linear(8,1) — stored as (in, out)
        "W1": kaiming(ks[0], (4, 8), 4),
        "b1": jax.random.uniform(ks[1], (8,), jnp.float32, -0.5, 0.5),
        "W2": kaiming(ks[2], (8, 1), 8),
        "b2": jax.random.uniform(ks[3], (1,), jnp.float32, -0.5, 0.5),
        # ffn2: LowRank(128,256,rank=30)
        "A1": kaiming(ks[4], (128, 30), 128),
        "B1": kaiming(ks[5], (30, 256), 30),
        "c1": jax.random.uniform(ks[6], (256,), jnp.float32, 0.0, 1.0),
        # ffn2: LowRank(256,1,rank=16)
        "A2": kaiming(ks[7], (256, 16), 256),
        "B2": kaiming(ks[8], (16, 1), 16),
        "c2": jax.random.uniform(ks[9], (1,), jnp.float32, 0.0, 1.0),
    }


if __name__ == "__main__":
    key = jax.random.PRNGKey(0)
    pkey, xkey = jax.random.split(key)
    params = init_params(pkey)
    prep = prepare_params(params)          # hoisted one-time constant folding

    # Input implied by the module: (batch, channels=4, seq=128)
    x = jax.random.normal(xkey, (2, N_CH, N_SEQ), dtype=jnp.float32)

    fwd = jax.jit(model_forward)
    out = jax.block_until_ready(fwd(x, prep))
    assert out.shape == (2, 1)

    # 1) Tight check vs a pure-JAX replica of the kernel's exact numerics.
    matched = model_forward_matched(x, prep)
    np.testing.assert_allclose(np.asarray(out), np.asarray(matched),
                               rtol=2e-3, atol=2e-3)

    # 2) Check vs the f32 module semantics (bf16 MXU inputs -> relaxed tolerance).
    ref = model_forward_ref(x, params)
    np.testing.assert_allclose(np.asarray(out), np.asarray(ref),
                               rtol=5e-2, atol=1e-1)

    print("KERNEL_OK")
</pallas_src>

<mosaic_0001>
module attributes {stable_mosaic.version = 11 : i64} {
  func.func @dct_lowrank_kernel(%arg0: i32, %arg1: memref<2x512xf32, #tpu.memory_space<vmem>>, %arg2: memref<512x1024xbf16, #tpu.memory_space<vmem>>, %arg3: memref<2x1024xf32, #tpu.memory_space<vmem>>, %arg4: memref<128x256xbf16, #tpu.memory_space<vmem>>, %arg5: memref<3x256xf32, #tpu.memory_space<vmem>>, %arg6: memref<1x2xf32, #tpu.memory_space<vmem>>) attributes {dimension_semantics = [#tpu.dimension_semantics<parallel>], iteration_bounds = array<i64: 1>, scalar_prefetch = 0 : i64, scratch_operands = 0 : i64, tpu.core_type = #tpu.core_type<tc>, window_params = [{transform_indices = @transform_0, window_bounds = array<i64: 2, 512>}, {pipeline_mode = #tpu.pipeline_mode<synchronous>, transform_indices = @transform_1, window_bounds = array<i64: 512, 1024>}, {pipeline_mode = #tpu.pipeline_mode<synchronous>, transform_indices = @transform_2, window_bounds = array<i64: 2, 1024>}, {pipeline_mode = #tpu.pipeline_mode<synchronous>, transform_indices = @transform_3, window_bounds = array<i64: 128, 256>}, {pipeline_mode = #tpu.pipeline_mode<synchronous>, transform_indices = @transform_4, window_bounds = array<i64: 3, 256>}, {transform_indices = @transform_5, window_bounds = array<i64: 1, 2>}]} {
    %c0 = arith.constant 0 : index
    %c0_0 = arith.constant 0 : index
    %0 = vector.load %arg1[%c0, %c0_0] : memref<2x512xf32, #tpu.memory_space<vmem>>, vector<2x512xf32>
    %1 = arith.truncf %0 : vector<2x512xf32> to vector<2x512xbf16>
    %c0_1 = arith.constant 0 : index
    %c0_2 = arith.constant 0 : index
    %2 = vector.load %arg2[%c0_1, %c0_2] : memref<512x1024xbf16, #tpu.memory_space<vmem>>, vector<512x1024xbf16>
    %cst = arith.constant dense<0.000000e+00> : vector<2x1024xf32>
    %3 = tpu.matmul %1, %2, %cst {dimension_numbers = #tpu.dot_dimension_numbers<[1], [0], [0], [1], [0, 0, 1, 1], [], []>} : vector<2x512xbf16>, vector<512x1024xbf16>, vector<2x1024xf32> -> vector<2x1024xf32>
    %c0_3 = arith.constant 0 : index
    %c0_4 = arith.constant 0 : index
    %4 = vector.load %arg3[%c0_3, %c0_4] : memref<2x1024xf32, #tpu.memory_space<vmem>>, vector<1x1024xf32>
    %5 = vector.broadcast %4 : vector<1x1024xf32> to vector<2x1024xf32>
    %6 = arith.addf %3, %5 : vector<2x1024xf32>
    %cst_5 = arith.constant 0.000000e+00 : f32
    %7 = vector.broadcast %cst_5 : f32 to vector<2x1024xf32>
    %8 = arith.maximumf %6, %7 : vector<2x1024xf32>
    %c1 = arith.constant 1 : index
    %c0_6 = arith.constant 0 : index
    %9 = vector.load %arg3[%c1, %c0_6] : memref<2x1024xf32, #tpu.memory_space<vmem>>, vector<1x1024xf32>
    %10 = vector.broadcast %9 : vector<1x1024xf32> to vector<2x1024xf32>
    %11 = arith.mulf %8, %10 : vector<2x1024xf32>
    %12 = vector.extract_strided_slice %11 {offsets = [0, 0], sizes = [2, 128], strides = [1, 1]} : vector<2x1024xf32> to vector<2x128xf32>
    %13 = vector.extract_strided_slice %11 {offsets = [0, 128], sizes = [2, 128], strides = [1, 1]} : vector<2x1024xf32> to vector<2x128xf32>
    %14 = arith.addf %12, %13 : vector<2x128xf32>
    %15 = vector.extract_strided_slice %11 {offsets = [0, 256], sizes = [2, 128], strides = [1, 1]} : vector<2x1024xf32> to vector<2x128xf32>
    %16 = arith.addf %14, %15 : vector<2x128xf32>
    %17 = vector.extract_strided_slice %11 {offsets = [0, 384], sizes = [2, 128], strides = [1, 1]} : vector<2x1024xf32> to vector<2x128xf32>
    %18 = arith.addf %16, %17 : vector<2x128xf32>
    %19 = vector.extract_strided_slice %11 {offsets = [0, 512], sizes = [2, 128], strides = [1, 1]} : vector<2x1024xf32> to vector<2x128xf32>
    %20 = arith.addf %18, %19 : vector<2x128xf32>
    %21 = vector.extract_strided_slice %11 {offsets = [0, 640], sizes = [2, 128], strides = [1, 1]} : vector<2x1024xf32> to vector<2x128xf32>
    %22 = arith.addf %20, %21 : vector<2x128xf32>
    %23 = vector.extract_strided_slice %11 {offsets = [0, 768], sizes = [2, 128], strides = [1, 1]} : vector<2x1024xf32> to vector<2x128xf32>
    %24 = arith.addf %22, %23 : vector<2x128xf32>
    %25 = vector.extract_strided_slice %11 {offsets = [0, 896], sizes = [2, 128], strides = [1, 1]} : vector<2x1024xf32> to vector<2x128xf32>
    %26 = arith.addf %24, %25 : vector<2x128xf32>
    %27 = arith.truncf %26 : vector<2x128xf32> to vector<2x128xbf16>
    %c0_7 = arith.constant 0 : index
    %c0_8 = arith.constant 0 : index
    %28 = vector.load %arg4[%c0_7, %c0_8] : memref<128x256xbf16, #tpu.memory_space<vmem>>, vector<128x256xbf16>
    %cst_9 = arith.constant dense<0.000000e+00> : vector<2x256xf32>
    %29 = tpu.matmul %27, %28, %cst_9 {dimension_numbers = #tpu.dot_dimension_numbers<[1], [0], [0], [1], [0, 0, 1, 1], [], []>} : vector<2x128xbf16>, vector<128x256xbf16>, vector<2x256xf32> -> vector<2x256xf32>
    %c0_10 = arith.constant 0 : index
    %c0_11 = arith.constant 0 : index
    %30 = vector.load %arg5[%c0_10, %c0_11] : memref<3x256xf32, #tpu.memory_space<vmem>>, vector<1x256xf32>
    %31 = vector.broadcast %30 : vector<1x256xf32> to vector<2x256xf32>
    %32 = arith.addf %29, %31 : vector<2x256xf32>
    %cst_12 = arith.constant 0.000000e+00 : f32
    %33 = vector.broadcast %cst_12 : f32 to vector<2x256xf32>
    %34 = arith.maximumf %32, %33 : vector<2x256xf32>
    %c1_13 = arith.constant 1 : index
    %c0_14 = arith.constant 0 : index
    %35 = vector.load %arg5[%c1_13, %c0_14] : memref<3x256xf32, #tpu.memory_space<vmem>>, vector<1x256xf32>
    %36 = vector.broadcast %35 : vector<1x256xf32> to vector<2x256xf32>
    %37 = arith.mulf %34, %36 : vector<2x256xf32>
    %cst_15 = arith.constant dense<0.000000e+00> : vector<2xf32>
    %38 = vector.multi_reduction <add>, %37, %cst_15 [1] : vector<2x256xf32> to vector<2xf32>
    %39 = vector.shape_cast %38 : vector<2xf32> to vector<2x1xf32>
    %c2 = arith.constant 2 : index
    %c0_16 = arith.constant 0 : index
    %40 = vector.load %arg5[%c2, %c0_16] : memref<3x256xf32, #tpu.memory_space<vmem>>, vector<1x1xf32>
    %41 = vector.broadcast %40 : vector<1x1xf32> to vector<2x1xf32>
    %42 = arith.addf %39, %41 : vector<2x1xf32>
    %43 = vector.shape_cast %42 : vector<2x1xf32> to vector<1x2xf32>
    %c0_17 = arith.constant 0 : index
    %c0_18 = arith.constant 0 : index
    %44 = vector.load %arg6[%c0_17, %c0_18] : memref<1x2xf32, #tpu.memory_space<vmem>>, vector<1x2xf32>
    tpu.vector_store %arg6[%c0_17, %c0_18], %43 {strides = array<i32>} : memref<1x2xf32, #tpu.memory_space<vmem>>, vector<1x2xf32>,
    return
  }
  func.func @transform_0(%arg0: i32) -> (i32, i32) {
    %c0_i32 = arith.constant 0 : i32
    %c0_i32_0 = arith.constant 0 : i32
    return %arg0, %c0_i32 : i32, i32
  }
  func.func @transform_1(%arg0: i32) -> (i32, i32) {
    %c0_i32 = arith.constant 0 : i32
    %c0_i32_0 = arith.constant 0 : i32
    %c0_i32_1 = arith.constant 0 : i32
    return %c0_i32, %c0_i32_0 : i32, i32
  }
  func.func @transform_2(%arg0: i32) -> (i32, i32) {
    %c0_i32 = arith.constant 0 : i32
    %c0_i32_0 = arith.constant 0 : i32
    %c0_i32_1 = arith.constant 0 : i32
    return %c0_i32, %c0_i32_0 : i32, i32
  }
  func.func @transform_3(%arg0: i32) -> (i32, i32) {
    %c0_i32 = arith.constant 0 : i32
    %c0_i32_0 = arith.constant 0 : i32
    %c0_i32_1 = arith.constant 0 : i32
    return %c0_i32, %c0_i32_0 : i32, i32
  }
  func.func @transform_4(%arg0: i32) -> (i32, i32) {
    %c0_i32 = arith.constant 0 : i32
    %c0_i32_0 = arith.constant 0 : i32
    %c0_i32_1 = arith.constant 0 : i32
    return %c0_i32, %c0_i32_0 : i32, i32
  }
  func.func @transform_5(%arg0: i32) -> (i32, i32) {
    %c0_i32 = arith.constant 0 : i32
    %c0_i32_0 = arith.constant 0 : i32
    return %arg0, %c0_i32 : i32, i32
  }
}

</mosaic_0001>

<llo_original>
// kernel: model_forward.1
$region0: #{model_forward.1}
  #allocation0 [shape = 'u32[]', space=smem, size = 0x4, offset = 0x4, fixed_abs, tag = 'smem constant byte address 0x4 - core index']
  #allocation1 [shape = 'u32[144,128]{1,0:T(1,128)}', space=vmem, size = 0x12000, scoped, tag = 'internal scratch']
  %s0 = inlined_call_operand.vmem [shape: f32[2,512], index: 0, kind: input, shape index: {}]
  %s1 = inlined_call_operand.hbm [shape: bf16[512,1024], index: 1, kind: input, shape index: {}]
  %s2 = inlined_call_operand.vmem [shape: f32[2,1024], index: 2, kind: input, shape index: {}]
  %s3 = inlined_call_operand.hbm [shape: bf16[128,256], index: 3, kind: input, shape index: {}]
  %s4 = inlined_call_operand.hbm [shape: f32[3,256], index: 4, kind: input, shape index: {}]
  %s5 = inlined_call_operand.hbm [shape: f32[1,2], index: 5, kind: output, shape index: {}]
  %s6 = sld [smem:[#allocation0]]
  $region42: #{model_forward.1} parent=0
    _
  %s8 = ssub.s32 1, %s6
  %s9 = scalar_select 0, %s8, %s6
  $region1: #{model_forward.1} parent=0
    #allocation2 [shape = 'u8[1048576]{0}', space=vmem, size = 0x100000, scoped, tag = 'input window, operand 1, single buffered']
    #allocation3 [shape = 's32[1]{0}', space=sflag, size = 0x4, scoped, tag = 'scoped memory for model_forward.1']
    #allocation4 [shape = 's32[1]{0}', space=sflag, size = 0x4, scoped, tag = 'scoped memory for model_forward.1']
    #allocation5 [shape = 'u8[65536]{0}', space=vmem, size = 0x10000, scoped, tag = 'input window, operand 3, single buffered']
    #allocation6 [shape = 's32[1]{0}', space=sflag, size = 0x4, scoped, tag = 'scoped memory for model_forward.1']
    #allocation7 [shape = 'u8[4096]{0}', space=vmem, size = 0x1000, scoped, tag = 'input window, operand 4, single buffered']
    #allocation8 [shape = 'u8[512]{0}', space=vmem, size = 0x400, scoped, tag = 'output window, operand 0, single buffered']
    %10 = vsyncpa [#allocation3], 0
    %11 = vsyncpa [#allocation6], 0
    %12 = vsyncpa [#allocation4], 0
    // Predicated region
    $region2: #{model_forward.1} parent=1 // pred_check
      _
    $region3: #{model_forward.1} parent=1 // pred_check_branch
      %14 = sbr.rel (0) target = $region5
    $region4: #{model_forward.1} parent=1 // pred_region
      _
    $region5: #{model_forward.1} parent=1 // pred_fallthru
      _
    // Predicated region
    $region6: #{model_forward.1} parent=1 // pred_check
      _
    $region7: #{model_forward.1} parent=1 // pred_check_branch
      %16 = sbr.rel (0) target = $region9
    $region8: #{model_forward.1} parent=1 // pred_region
      %s18 = ssub.s32 32768, 32768
      %19 = vsyncadd [#allocation3], %s18
      %s20 = sshll.u32 [#allocation2], 4
      %s21 = int_to_ptr.vmem [resolvable:$true] %s20
      %26 = dma.hbm_to_vmem [thread:$0]  %s1, 32768, %s21, [#allocation3], 512, 512, 32
    $region9: #{model_forward.1} parent=1 // pred_fallthru
      _
    // Predicated region
    $region10: #{model_forward.1} parent=1 // pred_check
      _
    $region11: #{model_forward.1} parent=1 // pred_check_branch
      %28 = sbr.rel (0) target = $region13
    $region12: #{model_forward.1} parent=1 // pred_region
      _
    $region13: #{model_forward.1} parent=1 // pred_fallthru
      _
    // Predicated region
    $region14: #{model_forward.1} parent=1 // pred_check
      _
    $region15: #{model_forward.1} parent=1 // pred_check_branch
      %30 = sbr.rel (0) target = $region17
    $region16: #{model_forward.1} parent=1 // pred_region
      %s32 = ssub.s32 2048, 2048
      %33 = vsyncadd [#allocation6], %s32
      %s34 = sshll.u32 [#allocation5], 4
      %s35 = int_to_ptr.vmem [resolvable:$true] %s34
      %40 = dma.hbm_to_vmem [thread:$0]  %s3, 2048, %s35, [#allocation6], 128, 128, 8
    $region17: #{model_forward.1} parent=1 // pred_fallthru
      _
    // Predicated region
    $region18: #{model_forward.1} parent=1 // pred_check
      _
    $region19: #{model_forward.1} parent=1 // pred_check_branch
      %42 = sbr.rel (0) target = $region21
    $region20: #{model_forward.1} parent=1 // pred_region
      %s44 = ssub.s32 128, 128
      %45 = vsyncadd [#allocation6], %s44
      %s47 = sshll.u32 [#allocation7], 4
      %s48 = int_to_ptr.vmem [resolvable:$true] %s47
      %50 = dma.hbm_to_vmem [thread:$0]  %s4, 128, %s48, [#allocation6]
    $region21: #{model_forward.1} parent=1 // pred_fallthru
      _
    // Predicated region
    $region22: #{model_forward.1} parent=1 // pred_check
      _
    $region23: #{model_forward.1} parent=1 // pred_check_branch
      %52 = sbr.rel (0) target = $region25
    $region24: #{model_forward.1} parent=1 // pred_region
      %53 = dma.done [#allocation3], 32768
    $region25: #{model_forward.1} parent=1 // pred_fallthru
      _
    // Predicated region
    $region26: #{model_forward.1} parent=1 // pred_check
      _
    $region27: #{model_forward.1} parent=1 // pred_check_branch
      %55 = sbr.rel (0) target = $region29
    $region28: #{model_forward.1} parent=1 // pred_region
      %56 = dma.done [#allocation6], 2048
    $region29: #{model_forward.1} parent=1 // pred_fallthru
      _
    // Predicated region
    $region30: #{model_forward.1} parent=1 // pred_check
      _
    $region31: #{model_forward.1} parent=1 // pred_check_branch
      %58 = sbr.rel (0) target = $region33
    $region32: #{model_forward.1} parent=1 // pred_region
      %59 = dma.done [#allocation6], 128
    $region33: #{model_forward.1} parent=1 // pred_fallthru
      _
    %v61 = vld [vmem:[%s0] sm:$0xff]
    %v63 = vcombine.high %v61, %v61
    %v65 = vunpack.c.l.s4 1983009808
    %v66 = vunpack.c.0.s8 %v65
    %v67 = vlaneseq
    %v68 = vshrl.u32 %v67, 7
    %v69 = vsub.s32 %v66, %v68
    %v70 = vrot.slane %v61, %v69
    %v72 = vunpack.c.l.s4 1983009808
    %v73 = vunpack.c.0.s8 %v72
    %v74 = vlaneseq
    %v75 = vshrl.u32 %v74, 7
    %v76 = vsub.s32 %v73, %v75
    %v77 = vrot.slane %v63, %v76
    %v78 = vcombine.high %v70, %v70
    %v79 = vcombine.high %v77, %v77
    %v84 = vpack.c.bf16 %v70, %v70
    %v85 = vpack.c.bf16 %v78, %v78
    %v86 = vpack.c.bf16 %v77, %v77
    %v87 = vpack.c.bf16 %v79, %v79
    %v88 = vld [vmem:[#allocation2] sm:$0xff]
    %v89 = vld [vmem:[#allocation2 + $0x8] sm:$0xff]
    %v90 = vld [vmem:[#allocation2 + $0x10] sm:$0xff]
    %v91 = vld [vmem:[#allocation2 + $0x18] sm:$0xff]
    %v92 = vld [vmem:[#allocation2 + $0x20] sm:$0xff]
    %v93 = vld [vmem:[#allocation2 + $0x28] sm:$0xff]
    %v94 = vld [vmem:[#allocation2 + $0x30] sm:$0xff]
    %v95 = vld [vmem:[#allocation2 + $0x38] sm:$0xff]
    %v96 = vld [vmem:[#allocation2 + $0x40] sm:$0xff]
    %v97 = vld [vmem:[#allocation2 + $0x48] sm:$0xff]
    %v98 = vld [vmem:[#allocation2 + $0x50] sm:$0xff]
    %v99 = vld [vmem:[#allocation2 + $0x58] sm:$0xff]
    %v100 = vld [vmem:[#allocation2 + $0x60] sm:$0xff]
    %v101 = vld [vmem:[#allocation2 + $0x68] sm:$0xff]
    %v102 = vld [vmem:[#allocation2 + $0x70] sm:$0xff]
    %v103 = vld [vmem:[#allocation2 + $0x78] sm:$0xff]
    %v104 = vld [vmem:[#allocation2 + $0x80] sm:$0xff]
    %v105 = vld [vmem:[#allocation2 + $0x88] sm:$0xff]
    %v106 = vld [vmem:[#allocation2 + $0x90] sm:$0xff]
    %v107 = vld [vmem:[#allocation2 + $0x98] sm:$0xff]
    %v108 = vld [vmem:[#allocation2 + $0xa0] sm:$0xff]
    %v109 = vld [vmem:[#allocation2 + $0xa8] sm:$0xff]
    %v110 = vld [vmem:[#allocation2 + $0xb0] sm:$0xff]
    %v111 = vld [vmem:[#allocation2 + $0xb8] sm:$0xff]
    %v112 = vld [vmem:[#allocation2 + $0xc0] sm:$0xff]
    %v113 = vld [vmem:[#allocation2 + $0xc8] sm:$0xff]
    %v114 = vld [vmem:[#allocation2 + $0xd0] sm:$0xff]
    %v115 = vld [vmem:[#allocation2 + $0xd8] sm:$0xff]
    %v116 = vld [vmem:[#allocation2 + $0xe0] sm:$0xff]
    %v117 = vld [vmem:[#allocation2 + $0xe8] sm:$0xff]
    %v118 = vld [vmem:[#allocation2 + $0xf0] sm:$0xff]
    %v119 = vld [vmem:[#allocation2 + $0xf8] sm:$0xff]
    %v120 = vld [vmem:[#allocation2 + $0x100] sm:$0xff]
    %v121 = vld [vmem:[#allocation2 + $0x108] sm:$0xff]
    %v122 = vld [vmem:[#allocation2 + $0x110] sm:$0xff]
    %v123 = vld [vmem:[#allocation2 + $0x118] sm:$0xff]
    %v124 = vld [vmem:[#allocation2 + $0x120] sm:$0xff]
    %v125 = vld [vmem:[#allocation2 + $0x128] sm:$0xff]
    %v126 = vld [vmem:[#allocation2 + $0x130] sm:$0xff]
    %v127 = vld [vmem:[#allocation2 + $0x138] sm:$0xff]
    %v128 = vld [vmem:[#allocation2 + $0x140] sm:$0xff]
    %v129 = vld [vmem:[#allocation2 + $0x148] sm:$0xff]
    %v130 = vld [vmem:[#allocation2 + $0x150] sm:$0xff]
    %v131 = vld [vmem:[#allocation2 + $0x158] sm:$0xff]
    %v132 = vld [vmem:[#allocation2 + $0x160] sm:$0xff]
    %v133 = vld [vmem:[#allocation2 + $0x168] sm:$0xff]
    %v134 = vld [vmem:[#allocation2 + $0x170] sm:$0xff]
    %v135 = vld [vmem:[#allocation2 + $0x178] sm:$0xff]
    %v136 = vld [vmem:[#allocation2 + $0x180] sm:$0xff]
    %v137 = vld [vmem:[#allocation2 + $0x188] sm:$0xff]
    %v138 = vld [vmem:[#allocation2 + $0x190] sm:$0xff]
    %v139 = vld [vmem:[#allocation2 + $0x198] sm:$0xff]
    %v140 = vld [vmem:[#allocation2 + $0x1a0] sm:$0xff]
    %v141 = vld [vmem:[#allocation2 + $0x1a8] sm:$0xff]
    %v142 = vld [vmem:[#allocation2 + $0x1b0] sm:$0xff]
    %v143 = vld [vmem:[#allocation2 + $0x1b8] sm:$0xff]
    %v144 = vld [vmem:[#allocation2 + $0x1c0] sm:$0xff]
    %v145 = vld [vmem:[#allocation2 + $0x1c8] sm:$0xff]
    %v146 = vld [vmem:[#allocation2 + $0x1d0] sm:$0xff]
    %v147 = vld [vmem:[#allocation2 + $0x1d8] sm:$0xff]
    %v148 = vld [vmem:[#allocation2 + $0x1e0] sm:$0xff]
    %v149 = vld [vmem:[#allocation2 + $0x1e8] sm:$0xff]
    %v150 = vld [vmem:[#allocation2 + $0x1f0] sm:$0xff]
    %v151 = vld [vmem:[#allocation2 + $0x1f8] sm:$0xff]
    %v152 = vld [vmem:[#allocation2 + $0x200] sm:$0xff]
    %v153 = vld [vmem:[#allocation2 + $0x208] sm:$0xff]
    %v154 = vld [vmem:[#allocation2 + $0x210] sm:$0xff]
    %v155 = vld [vmem:[#allocation2 + $0x218] sm:$0xff]
    %v156 = vld [vmem:[#allocation2 + $0x220] sm:$0xff]
    %v157 = vld [vmem:[#allocation2 + $0x228] sm:$0xff]
    %v158 = vld [vmem:[#allocation2 + $0x230] sm:$0xff]
    %v159 = vld [vmem:[#allocation2 + $0x238] sm:$0xff]
    %v160 = vld [vmem:[#allocation2 + $0x240] sm:$0xff]
    %v161 = vld [vmem:[#allocation2 + $0x248] sm:$0xff]
    %v162 = vld [vmem:[#allocation2 + $0x250] sm:$0xff]
    %v163 = vld [vmem:[#allocation2 + $0x258] sm:$0xff]
    %v164 = vld [vmem:[#allocation2 + $0x260] sm:$0xff]
    %v165 = vld [vmem:[#allocation2 + $0x268] sm:$0xff]
    %v166 = vld [vmem:[#allocation2 + $0x270] sm:$0xff]
    %v167 = vld [vmem:[#allocation2 + $0x278] sm:$0xff]
    %v168 = vld [vmem:[#allocation2 + $0x280] sm:$0xff]
    %v169 = vld [vmem:[#allocation2 + $0x288] sm:$0xff]
    %v170 = vld [vmem:[#allocation2 + $0x290] sm:$0xff]
    %v171 = vld [vmem:[#allocation2 + $0x298] sm:$0xff]
    %v172 = vld [vmem:[#allocation2 + $0x2a0] sm:$0xff]
    %v173 = vld [vmem:[#allocation2 + $0x2a8] sm:$0xff]
    %v174 = vld [vmem:[#allocation2 + $0x2b0] sm:$0xff]
    %v175 = vld [vmem:[#allocation2 + $0x2b8] sm:$0xff]
    %v176 = vld [vmem:[#allocation2 + $0x2c0] sm:$0xff]
    %v177 = vld [vmem:[#allocation2 + $0x2c8] sm:$0xff]
    %v178 = vld [vmem:[#allocation2 + $0x2d0] sm:$0xff]
    %v179 = vld [vmem:[#allocation2 + $0x2d8] sm:$0xff]
    %v180 = vld [vmem:[#allocation2 + $0x2e0] sm:$0xff]
    %v181 = vld [vmem:[#allocation2 + $0x2e8] sm:$0xff]
    %v182 = vld [vmem:[#allocation2 + $0x2f0] sm:$0xff]
    %v183 = vld [vmem:[#allocation2 + $0x2f8] sm:$0xff]
    %v184 = vld [vmem:[#allocation2 + $0x300] sm:$0xff]
    %v185 = vld [vmem:[#allocation2 + $0x308] sm:$0xff]
    %v186 = vld [vmem:[#allocation2 + $0x310] sm:$0xff]
    %v187 = vld [vmem:[#allocation2 + $0x318] sm:$0xff]
    %v188 = vld [vmem:[#allocation2 + $0x320] sm:$0xff]
    %v189 = vld [vmem:[#allocation2 + $0x328] sm:$0xff]
    %v190 = vld [vmem:[#allocation2 + $0x330] sm:$0xff]
    %v191 = vld [vmem:[#allocation2 + $0x338] sm:$0xff]
    %v192 = vld [vmem:[#allocation2 + $0x340] sm:$0xff]
    %v193 = vld [vmem:[#allocation2 + $0x348] sm:$0xff]
    %v194 = vld [vmem:[#allocation2 + $0x350] sm:$0xff]
    %v195 = vld [vmem:[#allocation2 + $0x358] sm:$0xff]
    %v196 = vld [vmem:[#allocation2 + $0x360] sm:$0xff]
    %v197 = vld [vmem:[#allocation2 + $0x368] sm:$0xff]
    %v198 = vld [vmem:[#allocation2 + $0x370] sm:$0xff]
    %v199 = vld [vmem:[#allocation2 + $0x378] sm:$0xff]
    %v200 = vld [vmem:[#allocation2 + $0x380] sm:$0xff]
    %v201 = vld [vmem:[#allocation2 + $0x388] sm:$0xff]
    %v202 = vld [vmem:[#allocation2 + $0x390] sm:$0xff]
    %v203 = vld [vmem:[#allocation2 + $0x398] sm:$0xff]
    %v204 = vld [vmem:[#allocation2 + $0x3a0] sm:$0xff]
    %v205 = vld [vmem:[#allocation2 + $0x3a8] sm:$0xff]
    %v206 = vld [vmem:[#allocation2 + $0x3b0] sm:$0xff]
    %v207 = vld [vmem:[#allocation2 + $0x3b8] sm:$0xff]
    %v208 = vld [vmem:[#allocation2 + $0x3c0] sm:$0xff]
    %v209 = vld [vmem:[#allocation2 + $0x3c8] sm:$0xff]
    %v210 = vld [vmem:[#allocation2 + $0x3d0] sm:$0xff]
    %v211 = vld [vmem:[#allocation2 + $0x3d8] sm:$0xff]
    %v212 = vld [vmem:[#allocation2 + $0x3e0] sm:$0xff]
    %v213 = vld [vmem:[#allocation2 + $0x3e8] sm:$0xff]
    %v214 = vld [vmem:[#allocation2 + $0x3f0] sm:$0xff]
    %v215 = vld [vmem:[#allocation2 + $0x3f8] sm:$0xff]
    %v216 = vld [vmem:[#allocation2 + $0x400] sm:$0xff]
    %v217 = vld [vmem:[#allocation2 + $0x408] sm:$0xff]
    %v218 = vld [vmem:[#allocation2 + $0x410] sm:$0xff]
    %v219 = vld [vmem:[#allocation2 + $0x418] sm:$0xff]
    %v220 = vld [vmem:[#allocation2 + $0x420] sm:$0xff]
    %v221 = vld [vmem:[#allocation2 + $0x428] sm:$0xff]
    %v222 = vld [vmem:[#allocation2 + $0x430] sm:$0xff]
    %v223 = vld [vmem:[#allocation2 + $0x438] sm:$0xff]
    %v224 = vld [vmem:[#allocation2 + $0x440] sm:$0xff]
    %v225 = vld [vmem:[#allocation2 + $0x448] sm:$0xff]
    %v226 = vld [vmem:[#allocation2 + $0x450] sm:$0xff]
    %v227 = vld [vmem:[#allocation2 + $0x458] sm:$0xff]
    %v228 = vld [vmem:[#allocation2 + $0x460] sm:$0xff]
    %v229 = vld [vmem:[#allocation2 + $0x468] sm:$0xff]
    %v230 = vld [vmem:[#allocation2 + $0x470] sm:$0xff]
    %v231 = vld [vmem:[#allocation2 + $0x478] sm:$0xff]
    %v232 = vld [vmem:[#allocation2 + $0x480] sm:$0xff]
    %v233 = vld [vmem:[#allocation2 + $0x488] sm:$0xff]
    %v234 = vld [vmem:[#allocation2 + $0x490] sm:$0xff]
    %v235 = vld [vmem:[#allocation2 + $0x498] sm:$0xff]
    %v236 = vld [vmem:[#allocation2 + $0x4a0] sm:$0xff]
    %v237 = vld [vmem:[#allocation2 + $0x4a8] sm:$0xff]
    %v238 = vld [vmem:[#allocation2 + $0x4b0] sm:$0xff]
    %v239 = vld [vmem:[#allocation2 + $0x4b8] sm:$0xff]
    %v240 = vld [vmem:[#allocation2 + $0x4c0] sm:$0xff]
    %v241 = vld [vmem:[#allocation2 + $0x4c8] sm:$0xff]
    %v242 = vld [vmem:[#allocation2 + $0x4d0] sm:$0xff]
    %v243 = vld [vmem:[#allocation2 + $0x4d8] sm:$0xff]
    %v244 = vld [vmem:[#allocation2 + $0x4e0] sm:$0xff]
    %v245 = vld [vmem:[#allocation2 + $0x4e8] sm:$0xff]
    %v246 = vld [vmem:[#allocation2 + $0x4f0] sm:$0xff]
    %v247 = vld [vmem:[#allocation2 + $0x4f8] sm:$0xff]
    %v248 = vld [vmem:[#allocation2 + $0x500] sm:$0xff]
    %v249 = vld [vmem:[#allocation2 + $0x508] sm:$0xff]
    %v250 = vld [vmem:[#allocation2 + $0x510] sm:$0xff]
    %v251 = vld [vmem:[#allocation2 + $0x518] sm:$0xff]
    %v252 = vld [vmem:[#allocation2 + $0x520] sm:$0xff]
    %v253 = vld [vmem:[#allocation2 + $0x528] sm:$0xff]
    %v254 = vld [vmem:[#allocation2 + $0x530] sm:$0xff]
    %v255 = vld [vmem:[#allocation2 + $0x538] sm:$0xff]
    %v256 = vld [vmem:[#allocation2 + $0x540] sm:$0xff]
    %v257 = vld [vmem:[#allocation2 + $0x548] sm:$0xff]
    %v258 = vld [vmem:[#allocation2 + $0x550] sm:$0xff]
    %v259 = vld [vmem:[#allocation2 + $0x558] sm:$0xff]
    %v260 = vld [vmem:[#allocation2 + $0x560] sm:$0xff]
    %v261 = vld [vmem:[#allocation2 + $0x568] sm:$0xff]
    %v262 = vld [vmem:[#allocation2 + $0x570] sm:$0xff]
    %v263 = vld [vmem:[#allocation2 + $0x578] sm:$0xff]
    %v264 = vld [vmem:[#allocation2 + $0x580] sm:$0xff]
    %v265 = vld [vmem:[#allocation2 + $0x588] sm:$0xff]
    %v266 = vld [vmem:[#allocation2 + $0x590] sm:$0xff]
    %v267 = vld [vmem:[#allocation2 + $0x598] sm:$0xff]
    %v268 = vld [vmem:[#allocation2 + $0x5a0] sm:$0xff]
    %v269 = vld [vmem:[#allocation2 + $0x5a8] sm:$0xff]
    %v270 = vld [vmem:[#allocation2 + $0x5b0] sm:$0xff]
    %v271 = vld [vmem:[#allocation2 + $0x5b8] sm:$0xff]
    %v272 = vld [vmem:[#allocation2 + $0x5c0] sm:$0xff]
    %v273 = vld [vmem:[#allocation2 + $0x5c8] sm:$0xff]
    %v274 = vld [vmem:[#allocation2 + $0x5d0] sm:$0xff]
    %v275 = vld [vmem:[#allocation2 + $0x5d8] sm:$0xff]
    %v276 = vld [vmem:[#allocation2 + $0x5e0] sm:$0xff]
    %v277 = vld [vmem:[#allocation2 + $0x5e8] sm:$0xff]
    %v278 = vld [vmem:[#allocation2 + $0x5f0] sm:$0xff]
    %v279 = vld [vmem:[#allocation2 + $0x5f8] sm:$0xff]
    %v280 = vld [vmem:[#allocation2 + $0x600] sm:$0xff]
    %v281 = vld [vmem:[#allocation2 + $0x608] sm:$0xff]
    %v282 = vld [vmem:[#allocation2 + $0x610] sm:$0xff]
    %v283 = vld [vmem:[#allocation2 + $0x618] sm:$0xff]
    %v284 = vld [vmem:[#allocation2 + $0x620] sm:$0xff]
    %v285 = vld [vmem:[#allocation2 + $0x628] sm:$0xff]
    %v286 = vld [vmem:[#allocation2 + $0x630] sm:$0xff]
    %v287 = vld [vmem:[#allocation2 + $0x638] sm:$0xff]
    %v288 = vld [vmem:[#allocation2 + $0x640] sm:$0xff]
    %v289 = vld [vmem:[#allocation2 + $0x648] sm:$0xff]
    %v290 = vld [vmem:[#allocation2 + $0x650] sm:$0xff]
    %v291 = vld [vmem:[#allocation2 + $0x658] sm:$0xff]
    %v292 = vld [vmem:[#allocation2 + $0x660] sm:$0xff]
    %v293 = vld [vmem:[#allocation2 + $0x668] sm:$0xff]
    %v294 = vld [vmem:[#allocation2 + $0x670] sm:$0xff]
    %v295 = vld [vmem:[#allocation2 + $0x678] sm:$0xff]
    %v296 = vld [vmem:[#allocation2 + $0x680] sm:$0xff]
    %v297 = vld [vmem:[#allocation2 + $0x688] sm:$0xff]
    %v298 = vld [vmem:[#allocation2 + $0x690] sm:$0xff]
    %v299 = vld [vmem:[#allocation2 + $0x698] sm:$0xff]
    %v300 = vld [vmem:[#allocation2 + $0x6a0] sm:$0xff]
    %v301 = vld [vmem:[#allocation2 + $0x6a8] sm:$0xff]
    %v302 = vld [vmem:[#allocation2 + $0x6b0] sm:$0xff]
    %v303 = vld [vmem:[#allocation2 + $0x6b8] sm:$0xff]
    %v304 = vld [vmem:[#allocation2 + $0x6c0] sm:$0xff]
    %v305 = vld [vmem:[#allocation2 + $0x6c8] sm:$0xff]
    %v306 = vld [vmem:[#allocation2 + $0x6d0] sm:$0xff]
    %v307 = vld [vmem:[#allocation2 + $0x6d8] sm:$0xff]
    %v308 = vld [vmem:[#allocation2 + $0x6e0] sm:$0xff]
    %v309 = vld [vmem:[#allocation2 + $0x6e8] sm:$0xff]
    %v310 = vld [vmem:[#allocation2 + $0x6f0] sm:$0xff]
    %v311 = vld [vmem:[#allocation2 + $0x6f8] sm:$0xff]
    %v312 = vld [vmem:[#allocation2 + $0x700] sm:$0xff]
    %v313 = vld [vmem:[#allocation2 + $0x708] sm:$0xff]
    %v314 = vld [vmem:[#allocation2 + $0x710] sm:$0xff]
    %v315 = vld [vmem:[#allocation2 + $0x718] sm:$0xff]
    %v316 = vld [vmem:[#allocation2 + $0x720] sm:$0xff]
    %v317 = vld [vmem:[#allocation2 + $0x728] sm:$0xff]
    %v318 = vld [vmem:[#allocation2 + $0x730] sm:$0xff]
    %v319 = vld [vmem:[#allocation2 + $0x738] sm:$0xff]
    %v320 = vld [vmem:[#allocation2 + $0x740] sm:$0xff]
    %v321 = vld [vmem:[#allocation2 + $0x748] sm:$0xff]
    %v322 = vld [vmem:[#allocation2 + $0x750] sm:$0xff]
    %v323 = vld [vmem:[#allocation2 + $0x758] sm:$0xff]
    %v324 = vld [vmem:[#allocation2 + $0x760] sm:$0xff]
    %v325 = vld [vmem:[#allocation2 + $0x768] sm:$0xff]
    %v326 = vld [vmem:[#allocation2 + $0x770] sm:$0xff]
    %v327 = vld [vmem:[#allocation2 + $0x778] sm:$0xff]
    %v328 = vld [vmem:[#allocation2 + $0x780] sm:$0xff]
    %v329 = vld [vmem:[#allocation2 + $0x788] sm:$0xff]
    %v330 = vld [vmem:[#allocation2 + $0x790] sm:$0xff]
    %v331 = vld [vmem:[#allocation2 + $0x798] sm:$0xff]
    %v332 = vld [vmem:[#allocation2 + $0x7a0] sm:$0xff]
    %v333 = vld [vmem:[#allocation2 + $0x7a8] sm:$0xff]
    %v334 = vld [vmem:[#allocation2 + $0x7b0] sm:$0xff]
    %v335 = vld [vmem:[#allocation2 + $0x7b8] sm:$0xff]
    %v336 = vld [vmem:[#allocation2 + $0x7c0] sm:$0xff]
    %v337 = vld [vmem:[#allocation2 + $0x7c8] sm:$0xff]
    %v338 = vld [vmem:[#allocation2 + $0x7d0] sm:$0xff]
    %v339 = vld [vmem:[#allocation2 + $0x7d8] sm:$0xff]
    %v340 = vld [vmem:[#allocation2 + $0x7e0] sm:$0xff]
    %v341 = vld [vmem:[#allocation2 + $0x7e8] sm:$0xff]
    %v342 = vld [vmem:[#allocation2 + $0x7f0] sm:$0xff]
    %v343 = vld [vmem:[#allocation2 + $0x7f8] sm:$0xff]
    %v344 = vld [vmem:[%s2] ss:$2 sm:$0xff]
    %v346 = vlaneseq
    %v347 = vshrl.u32 %v346, 7
    %v348 = vsub.s32 0, %v347
    %v349 = vrot.slane %v344, %v348
    %v350 = vlaneseq
    %v351 = vshrl.u32 %v350, 7
    %v352 = vsub.s32 1, %v351
    %v353 = vrot.slane %v344, %v352
    %v354 = vlaneseq
    %v355 = vshrl.u32 %v354, 7
    %v356 = vsub.s32 2, %v355
    %v357 = vrot.slane %v344, %v356
    %v358 = vlaneseq
    %v359 = vshrl.u32 %v358, 7
    %v360 = vsub.s32 3, %v359
    %v361 = vrot.slane %v344, %v360
    %v362 = vlaneseq
    %v363 = vshrl.u32 %v362, 7
    %v364 = vsub.s32 4, %v363
    %v365 = vrot.slane %v344, %v364
    %v366 = vlaneseq
    %v367 = vshrl.u32 %v366, 7
    %v368 = vsub.s32 5, %v367
    %v369 = vrot.slane %v344, %v368
    %v370 = vlaneseq
    %v371 = vshrl.u32 %v370, 7
    %v372 = vsub.s32 6, %v371
    %v373 = vrot.slane %v344, %v372
    %v374 = vlaneseq
    %v375 = vshrl.u32 %v374, 7
    %v376 = vsub.s32 7, %v375
    %v377 = vrot.slane %v344, %v376
    %v642 = vunpack.c.l.b16 %v88
    %v643 = vunpack.c.h.b16 %v88
    %v644 = vunpack.c.l.b16 %v89
    %v645 = vunpack.c.h.b16 %v89
    %v646 = vunpack.c.l.b16 %v90
    %v647 = vunpack.c.h.b16 %v90
    %v648 = vunpack.c.l.b16 %v91
    %v649 = vunpack.c.h.b16 %v91
    %v650 = vunpack.c.l.b16 %v92
    %v651 = vunpack.c.h.b16 %v92
    %v652 = vunpack.c.l.b16 %v93
    %v653 = vunpack.c.h.b16 %v93
    %v654 = vunpack.c.l.b16 %v94
    %v655 = vunpack.c.h.b16 %v94
    %v656 = vunpack.c.l.b16 %v95
    %v657 = vunpack.c.h.b16 %v95
    %v658 = vunpack.c.l.b16 %v96
    %v659 = vunpack.c.h.b16 %v96
    %v660 = vunpack.c.l.b16 %v97
    %v661 = vunpack.c.h.b16 %v97
    %v662 = vunpack.c.l.b16 %v98
    %v663 = vunpack.c.h.b16 %v98
    %v664 = vunpack.c.l.b16 %v99
    %v665 = vunpack.c.h.b16 %v99
    %v666 = vunpack.c.l.b16 %v100
    %v667 = vunpack.c.h.b16 %v100
    %v668 = vunpack.c.l.b16 %v101
    %v669 = vunpack.c.h.b16 %v101
    %v670 = vunpack.c.l.b16 %v102
    %v671 = vunpack.c.h.b16 %v102
    %v672 = vunpack.c.l.b16 %v103
    %v673 = vunpack.c.h.b16 %v103
    %v674 = vunpack.c.l.b16 %v104
    %v675 = vunpack.c.h.b16 %v104
    %v676 = vunpack.c.l.b16 %v105
    %v677 = vunpack.c.h.b16 %v105
    %v678 = vunpack.c.l.b16 %v106
    %v679 = vunpack.c.h.b16 %v106
    %v680 = vunpack.c.l.b16 %v107
    %v681 = vunpack.c.h.b16 %v107
    %v682 = vunpack.c.l.b16 %v108
    %v683 = vunpack.c.h.b16 %v108
    %v684 = vunpack.c.l.b16 %v109
    %v685 = vunpack.c.h.b16 %v109
    %v686 = vunpack.c.l.b16 %v110
    %v687 = vunpack.c.h.b16 %v110
    %v688 = vunpack.c.l.b16 %v111
    %v689 = vunpack.c.h.b16 %v111
    %v690 = vunpack.c.l.b16 %v112
    %v691 = vunpack.c.h.b16 %v112
    %v692 = vunpack.c.l.b16 %v113
    %v693 = vunpack.c.h.b16 %v113
    %v694 = vunpack.c.l.b16 %v114
    %v695 = vunpack.c.h.b16 %v114
    %v696 = vunpack.c.l.b16 %v115
    %v697 = vunpack.c.h.b16 %v115
    %v698 = vunpack.c.l.b16 %v116
    %v699 = vunpack.c.h.b16 %v116
    %v700 = vunpack.c.l.b16 %v117
    %v701 = vunpack.c.h.b16 %v117
    %v702 = vunpack.c.l.b16 %v118
    %v703 = vunpack.c.h.b16 %v118
    %v704 = vunpack.c.l.b16 %v119
    %v705 = vunpack.c.h.b16 %v119
    %v706 = vunpack.c.l.b16 %v120
    %v707 = vunpack.c.h.b16 %v120
    %v708 = vunpack.c.l.b16 %v121
    %v709 = vunpack.c.h.b16 %v121
    %v710 = vunpack.c.l.b16 %v122
    %v711 = vunpack.c.h.b16 %v122
    %v712 = vunpack.c.l.b16 %v123
    %v713 = vunpack.c.h.b16 %v123
    %v714 = vunpack.c.l.b16 %v124
    %v715 = vunpack.c.h.b16 %v124
    %v716 = vunpack.c.l.b16 %v125
    %v717 = vunpack.c.h.b16 %v125
    %v718 = vunpack.c.l.b16 %v126
    %v719 = vunpack.c.h.b16 %v126
    %v720 = vunpack.c.l.b16 %v127
    %v721 = vunpack.c.h.b16 %v127
    %v722 = vunpack.c.l.b16 %v128
    %v723 = vunpack.c.h.b16 %v128
    %v724 = vunpack.c.l.b16 %v129
    %v725 = vunpack.c.h.b16 %v129
    %v726 = vunpack.c.l.b16 %v130
    %v727 = vunpack.c.h.b16 %v130
    %v728 = vunpack.c.l.b16 %v131
    %v729 = vunpack.c.h.b16 %v131
    %v730 = vunpack.c.l.b16 %v132
    %v731 = vunpack.c.h.b16 %v132
    %v732 = vunpack.c.l.b16 %v133
    %v733 = vunpack.c.h.b16 %v133
    %v734 = vunpack.c.l.b16 %v134
    %v735 = vunpack.c.h.b16 %v134
    %v736 = vunpack.c.l.b16 %v135
    %v737 = vunpack.c.h.b16 %v135
    %v738 = vunpack.c.l.b16 %v136
    %v739 = vunpack.c.h.b16 %v136
    %v740 = vunpack.c.l.b16 %v137
    %v741 = vunpack.c.h.b16 %v137
    %v742 = vunpack.c.l.b16 %v138
    %v743 = vunpack.c.h.b16 %v138
    %v744 = vunpack.c.l.b16 %v139
    %v745 = vunpack.c.h.b16 %v139
    %v746 = vunpack.c.l.b16 %v140
    %v747 = vunpack.c.h.b16 %v140
    %v748 = vunpack.c.l.b16 %v141
    %v749 = vunpack.c.h.b16 %v141
    %v750 = vunpack.c.l.b16 %v142
    %v751 = vunpack.c.h.b16 %v142
    %v752 = vunpack.c.l.b16 %v143
    %v753 = vunpack.c.h.b16 %v143
    %v754 = vunpack.c.l.b16 %v144
    %v755 = vunpack.c.h.b16 %v144
    %v756 = vunpack.c.l.b16 %v145
    %v757 = vunpack.c.h.b16 %v145
    %v758 = vunpack.c.l.b16 %v146
    %v759 = vunpack.c.h.b16 %v146
    %v760 = vunpack.c.l.b16 %v147
    %v761 = vunpack.c.h.b16 %v147
    %v762 = vunpack.c.l.b16 %v148
    %v763 = vunpack.c.h.b16 %v148
    %v764 = vunpack.c.l.b16 %v149
    %v765 = vunpack.c.h.b16 %v149
    %v766 = vunpack.c.l.b16 %v150
    %v767 = vunpack.c.h.b16 %v150
    %v768 = vunpack.c.l.b16 %v151
    %v769 = vunpack.c.h.b16 %v151
    %v770 = vunpack.c.l.b16 %v152
    %v771 = vunpack.c.h.b16 %v152
    %v772 = vunpack.c.l.b16 %v153
    %v773 = vunpack.c.h.b16 %v153
    %v774 = vunpack.c.l.b16 %v154
    %v775 = vunpack.c.h.b16 %v154
    %v776 = vunpack.c.l.b16 %v155
    %v777 = vunpack.c.h.b16 %v155
    %v778 = vunpack.c.l.b16 %v156
    %v779 = vunpack.c.h.b16 %v156
    %v780 = vunpack.c.l.b16 %v157
    %v781 = vunpack.c.h.b16 %v157
    %v782 = vunpack.c.l.b16 %v158
    %v783 = vunpack.c.h.b16 %v158
    %v784 = vunpack.c.l.b16 %v159
    %v785 = vunpack.c.h.b16 %v159
    %v786 = vunpack.c.l.b16 %v160
    %v787 = vunpack.c.h.b16 %v160
    %v788 = vunpack.c.l.b16 %v161
    %v789 = vunpack.c.h.b16 %v161
    %v790 = vunpack.c.l.b16 %v162
    %v791 = vunpack.c.h.b16 %v162
    %v792 = vunpack.c.l.b16 %v163
    %v793 = vunpack.c.h.b16 %v163
    %v794 = vunpack.c.l.b16 %v164
    %v795 = vunpack.c.h.b16 %v164
    %v796 = vunpack.c.l.b16 %v165
    %v797 = vunpack.c.h.b16 %v165
    %v798 = vunpack.c.l.b16 %v166
    %v799 = vunpack.c.h.b16 %v166
    %v800 = vunpack.c.l.b16 %v167
    %v801 = vunpack.c.h.b16 %v167
    %v802 = vunpack.c.l.b16 %v168
    %v803 = vunpack.c.h.b16 %v168
    %v804 = vunpack.c.l.b16 %v169
    %v805 = vunpack.c.h.b16 %v169
    %v806 = vunpack.c.l.b16 %v170
    %v807 = vunpack.c.h.b16 %v170
    %v808 = vunpack.c.l.b16 %v171
    %v809 = vunpack.c.h.b16 %v171
    %v810 = vunpack.c.l.b16 %v172
    %v811 = vunpack.c.h.b16 %v172
    %v812 = vunpack.c.l.b16 %v173
    %v813 = vunpack.c.h.b16 %v173
    %v814 = vunpack.c.l.b16 %v174
    %v815 = vunpack.c.h.b16 %v174
    %v816 = vunpack.c.l.b16 %v175
    %v817 = vunpack.c.h.b16 %v175
    %v818 = vunpack.c.l.b16 %v176
    %v819 = vunpack.c.h.b16 %v176
    %v820 = vunpack.c.l.b16 %v177
    %v821 = vunpack.c.h.b16 %v177
    %v822 = vunpack.c.l.b16 %v178
    %v823 = vunpack.c.h.b16 %v178
    %v824 = vunpack.c.l.b16 %v179
    %v825 = vunpack.c.h.b16 %v179
    %v826 = vunpack.c.l.b16 %v180
    %v827 = vunpack.c.h.b16 %v180
    %v828 = vunpack.c.l.b16 %v181
    %v829 = vunpack.c.h.b16 %v181
    %v830 = vunpack.c.l.b16 %v182
    %v831 = vunpack.c.h.b16 %v182
    %v832 = vunpack.c.l.b16 %v183
    %v833 = vunpack.c.h.b16 %v183
    %v834 = vunpack.c.l.b16 %v184
    %v835 = vunpack.c.h.b16 %v184
    %v836 = vunpack.c.l.b16 %v185
    %v837 = vunpack.c.h.b16 %v185
    %v838 = vunpack.c.l.b16 %v186
    %v839 = vunpack.c.h.b16 %v186
    %v840 = vunpack.c.l.b16 %v187
    %v841 = vunpack.c.h.b16 %v187
    %v842 = vunpack.c.l.b16 %v188
    %v843 = vunpack.c.h.b16 %v188
    %v844 = vunpack.c.l.b16 %v189
    %v845 = vunpack.c.h.b16 %v189
    %v846 = vunpack.c.l.b16 %v190
    %v847 = vunpack.c.h.b16 %v190
    %v848 = vunpack.c.l.b16 %v191
    %v849 = vunpack.c.h.b16 %v191
    %v850 = vunpack.c.l.b16 %v192
    %v851 = vunpack.c.h.b16 %v192
    %v852 = vunpack.c.l.b16 %v193
    %v853 = vunpack.c.h.b16 %v193
    %v854 = vunpack.c.l.b16 %v194
    %v855 = vunpack.c.h.b16 %v194
    %v856 = vunpack.c.l.b16 %v195
    %v857 = vunpack.c.h.b16 %v195
    %v858 = vunpack.c.l.b16 %v196
    %v859 = vunpack.c.h.b16 %v196
    %v860 = vunpack.c.l.b16 %v197
    %v861 = vunpack.c.h.b16 %v197
    %v862 = vunpack.c.l.b16 %v198
    %v863 = vunpack.c.h.b16 %v198
    %v864 = vunpack.c.l.b16 %v199
    %v865 = vunpack.c.h.b16 %v199
    %v866 = vunpack.c.l.b16 %v200
    %v867 = vunpack.c.h.b16 %v200
    %v868 = vunpack.c.l.b16 %v201
    %v869 = vunpack.c.h.b16 %v201
    %v870 = vunpack.c.l.b16 %v202
    %v871 = vunpack.c.h.b16 %v202
    %v872 = vunpack.c.l.b16 %v203
    %v873 = vunpack.c.h.b16 %v203
    %v874 = vunpack.c.l.b16 %v204
    %v875 = vunpack.c.h.b16 %v204
    %v876 = vunpack.c.l.b16 %v205
    %v877 = vunpack.c.h.b16 %v205
    %v878 = vunpack.c.l.b16 %v206
    %v879 = vunpack.c.h.b16 %v206
    %v880 = vunpack.c.l.b16 %v207
    %v881 = vunpack.c.h.b16 %v207
    %v882 = vunpack.c.l.b16 %v208
    %v883 = vunpack.c.h.b16 %v208
    %v884 = vunpack.c.l.b16 %v209
    %v885 = vunpack.c.h.b16 %v209
    %v886 = vunpack.c.l.b16 %v210
    %v887 = vunpack.c.h.b16 %v210
    %v888 = vunpack.c.l.b16 %v211
    %v889 = vunpack.c.h.b16 %v211
    %v890 = vunpack.c.l.b16 %v212
    %v891 = vunpack.c.h.b16 %v212
    %v892 = vunpack.c.l.b16 %v213
    %v893 = vunpack.c.h.b16 %v213
    %v894 = vunpack.c.l.b16 %v214
    %v895 = vunpack.c.h.b16 %v214
    %v896 = vunpack.c.l.b16 %v215
    %v897 = vunpack.c.h.b16 %v215
    %v898 = vunpack.c.l.b16 %v216
    %v899 = vunpack.c.h.b16 %v216
    %v900 = vunpack.c.l.b16 %v217
    %v901 = vunpack.c.h.b16 %v217
    %v902 = vunpack.c.l.b16 %v218
    %v903 = vunpack.c.h.b16 %v218
    %v904 = vunpack.c.l.b16 %v219
    %v905 = vunpack.c.h.b16 %v219
    %v906 = vunpack.c.l.b16 %v220
    %v907 = vunpack.c.h.b16 %v220
    %v908 = vunpack.c.l.b16 %v221
    %v909 = vunpack.c.h.b16 %v221
    %v910 = vunpack.c.l.b16 %v222
    %v911 = vunpack.c.h.b16 %v222
    %v912 = vunpack.c.l.b16 %v223
    %v913 = vunpack.c.h.b16 %v223
    %v914 = vunpack.c.l.b16 %v224
    %v915 = vunpack.c.h.b16 %v224
    %v916 = vunpack.c.l.b16 %v225
    %v917 = vunpack.c.h.b16 %v225
    %v918 = vunpack.c.l.b16 %v226
    %v919 = vunpack.c.h.b16 %v226
    %v920 = vunpack.c.l.b16 %v227
    %v921 = vunpack.c.h.b16 %v227
    %v922 = vunpack.c.l.b16 %v228
    %v923 = vunpack.c.h.b16 %v228
    %v924 = vunpack.c.l.b16 %v229
    %v925 = vunpack.c.h.b16 %v229
    %v926 = vunpack.c.l.b16 %v230
    %v927 = vunpack.c.h.b16 %v230
    %v928 = vunpack.c.l.b16 %v231
    %v929 = vunpack.c.h.b16 %v231
    %v930 = vunpack.c.l.b16 %v232
    %v931 = vunpack.c.h.b16 %v232
    %v932 = vunpack.c.l.b16 %v233
    %v933 = vunpack.c.h.b16 %v233
    %v934 = vunpack.c.l.b16 %v234
    %v935 = vunpack.c.h.b16 %v234
    %v936 = vunpack.c.l.b16 %v235
    %v937 = vunpack.c.h.b16 %v235
    %v938 = vunpack.c.l.b16 %v236
    %v939 = vunpack.c.h.b16 %v236
    %v940 = vunpack.c.l.b16 %v237
    %v941 = vunpack.c.h.b16 %v237
    %v942 = vunpack.c.l.b16 %v238
    %v943 = vunpack.c.h.b16 %v238
    %v944 = vunpack.c.l.b16 %v239
    %v945 = vunpack.c.h.b16 %v239
    %v946 = vunpack.c.l.b16 %v240
    %v947 = vunpack.c.h.b16 %v240
    %v948 = vunpack.c.l.b16 %v241
    %v949 = vunpack.c.h.b16 %v241
    %v950 = vunpack.c.l.b16 %v242
    %v951 = vunpack.c.h.b16 %v242
    %v952 = vunpack.c.l.b16 %v243
    %v953 = vunpack.c.h.b16 %v243
    %v954 = vunpack.c.l.b16 %v244
    %v955 = vunpack.c.h.b16 %v244
    %v956 = vunpack.c.l.b16 %v245
    %v957 = vunpack.c.h.b16 %v245
    %v958 = vunpack.c.l.b16 %v246
    %v959 = vunpack.c.h.b16 %v246
    %v960 = vunpack.c.l.b16 %v247
    %v961 = vunpack.c.h.b16 %v247
    %v962 = vunpack.c.l.b16 %v248
    %v963 = vunpack.c.h.b16 %v248
    %v964 = vunpack.c.l.b16 %v249
    %v965 = vunpack.c.h.b16 %v249
    %v966 = vunpack.c.l.b16 %v250
    %v967 = vunpack.c.h.b16 %v250
    %v968 = vunpack.c.l.b16 %v251
    %v969 = vunpack.c.h.b16 %v251
    %v970 = vunpack.c.l.b16 %v252
    %v971 = vunpack.c.h.b16 %v252
    %v972 = vunpack.c.l.b16 %v253
    %v973 = vunpack.c.h.b16 %v253
    %v974 = vunpack.c.l.b16 %v254
    %v975 = vunpack.c.h.b16 %v254
    %v976 = vunpack.c.l.b16 %v255
    %v977 = vunpack.c.h.b16 %v255
    %v978 = vunpack.c.l.b16 %v256
    %v979 = vunpack.c.h.b16 %v256
    %v980 = vunpack.c.l.b16 %v257
    %v981 = vunpack.c.h.b16 %v257
    %v982 = vunpack.c.l.b16 %v258
    %v983 = vunpack.c.h.b16 %v258
    %v984 = vunpack.c.l.b16 %v259
    %v985 = vunpack.c.h.b16 %v259
    %v986 = vunpack.c.l.b16 %v260
    %v987 = vunpack.c.h.b16 %v260
    %v988 = vunpack.c.l.b16 %v261
    %v989 = vunpack.c.h.b16 %v261
    %v990 = vunpack.c.l.b16 %v262
    %v991 = vunpack.c.h.b16 %v262
    %v992 = vunpack.c.l.b16 %v263
    %v993 = vunpack.c.h.b16 %v263
    %v994 = vunpack.c.l.b16 %v264
    %v995 = vunpack.c.h.b16 %v264
    %v996 = vunpack.c.l.b16 %v265
    %v997 = vunpack.c.h.b16 %v265
    %v998 = vunpack.c.l.b16 %v266
    %v999 = vunpack.c.h.b16 %v266
    %v1000 = vunpack.c.l.b16 %v267
    %v1001 = vunpack.c.h.b16 %v267
    %v1002 = vunpack.c.l.b16 %v268
    %v1003 = vunpack.c.h.b16 %v268
    %v1004 = vunpack.c.l.b16 %v269
    %v1005 = vunpack.c.h.b16 %v269
    %v1006 = vunpack.c.l.b16 %v270
    %v1007 = vunpack.c.h.b16 %v270
    %v1008 = vunpack.c.l.b16 %v271
    %v1009 = vunpack.c.h.b16 %v271
    %v1010 = vunpack.c.l.b16 %v272
    %v1011 = vunpack.c.h.b16 %v272
    %v1012 = vunpack.c.l.b16 %v273
    %v1013 = vunpack.c.h.b16 %v273
    %v1014 = vunpack.c.l.b16 %v274
    %v1015 = vunpack.c.h.b16 %v274
    %v1016 = vunpack.c.l.b16 %v275
    %v1017 = vunpack.c.h.b16 %v275
    %v1018 = vunpack.c.l.b16 %v276
    %v1019 = vunpack.c.h.b16 %v276
    %v1020 = vunpack.c.l.b16 %v277
    %v1021 = vunpack.c.h.b16 %v277
    %v1022 = vunpack.c.l.b16 %v278
    %v1023 = vunpack.c.h.b16 %v278
    %v1024 = vunpack.c.l.b16 %v279
    %v1025 = vunpack.c.h.b16 %v279
    %v1026 = vunpack.c.l.b16 %v280
    %v1027 = vunpack.c.h.b16 %v280
    %v1028 = vunpack.c.l.b16 %v281
    %v1029 = vunpack.c.h.b16 %v281
    %v1030 = vunpack.c.l.b16 %v282
    %v1031 = vunpack.c.h.b16 %v282
    %v1032 = vunpack.c.l.b16 %v283
    %v1033 = vunpack.c.h.b16 %v283
    %v1034 = vunpack.c.l.b16 %v284
    %v1035 = vunpack.c.h.b16 %v284
    %v1036 = vunpack.c.l.b16 %v285
    %v1037 = vunpack.c.h.b16 %v285
    %v1038 = vunpack.c.l.b16 %v286
    %v1039 = vunpack.c.h.b16 %v286
    %v1040 = vunpack.c.l.b16 %v287
    %v1041 = vunpack.c.h.b16 %v287
    %v1042 = vunpack.c.l.b16 %v288
    %v1043 = vunpack.c.h.b16 %v288
    %v1044 = vunpack.c.l.b16 %v289
    %v1045 = vunpack.c.h.b16 %v289
    %v1046 = vunpack.c.l.b16 %v290
    %v1047 = vunpack.c.h.b16 %v290
    %v1048 = vunpack.c.l.b16 %v291
    %v1049 = vunpack.c.h.b16 %v291
    %v1050 = vunpack.c.l.b16 %v292
    %v1051 = vunpack.c.h.b16 %v292
    %v1052 = vunpack.c.l.b16 %v293
    %v1053 = vunpack.c.h.b16 %v293
    %v1054 = vunpack.c.l.b16 %v294
    %v1055 = vunpack.c.h.b16 %v294
    %v1056 = vunpack.c.l.b16 %v295
    %v1057 = vunpack.c.h.b16 %v295
    %v1058 = vunpack.c.l.b16 %v296
    %v1059 = vunpack.c.h.b16 %v296
    %v1060 = vunpack.c.l.b16 %v297
    %v1061 = vunpack.c.h.b16 %v297
    %v1062 = vunpack.c.l.b16 %v298
    %v1063 = vunpack.c.h.b16 %v298
    %v1064 = vunpack.c.l.b16 %v299
    %v1065 = vunpack.c.h.b16 %v299
    %v1066 = vunpack.c.l.b16 %v300
    %v1067 = vunpack.c.h.b16 %v300
    %v1068 = vunpack.c.l.b16 %v301
    %v1069 = vunpack.c.h.b16 %v301
    %v1070 = vunpack.c.l.b16 %v302
    %v1071 = vunpack.c.h.b16 %v302
    %v1072 = vunpack.c.l.b16 %v303
    %v1073 = vunpack.c.h.b16 %v303
    %v1074 = vunpack.c.l.b16 %v304
    %v1075 = vunpack.c.h.b16 %v304
    %v1076 = vunpack.c.l.b16 %v305
    %v1077 = vunpack.c.h.b16 %v305
    %v1078 = vunpack.c.l.b16 %v306
    %v1079 = vunpack.c.h.b16 %v306
    %v1080 = vunpack.c.l.b16 %v307
    %v1081 = vunpack.c.h.b16 %v307
    %v1082 = vunpack.c.l.b16 %v308
    %v1083 = vunpack.c.h.b16 %v308
    %v1084 = vunpack.c.l.b16 %v309
    %v1085 = vunpack.c.h.b16 %v309
    %v1086 = vunpack.c.l.b16 %v310
    %v1087 = vunpack.c.h.b16 %v310
    %v1088 = vunpack.c.l.b16 %v311
    %v1089 = vunpack.c.h.b16 %v311
    %v1090 = vunpack.c.l.b16 %v312
    %v1091 = vunpack.c.h.b16 %v312
    %v1092 = vunpack.c.l.b16 %v313
    %v1093 = vunpack.c.h.b16 %v313
    %v1094 = vunpack.c.l.b16 %v314
    %v1095 = vunpack.c.h.b16 %v314
    %v1096 = vunpack.c.l.b16 %v315
    %v1097 = vunpack.c.h.b16 %v315
    %v1098 = vunpack.c.l.b16 %v316
    %v1099 = vunpack.c.h.b16 %v316
    %v1100 = vunpack.c.l.b16 %v317
    %v1101 = vunpack.c.h.b16 %v317
    %v1102 = vunpack.c.l.b16 %v318
    %v1103 = vunpack.c.h.b16 %v318
    %v1104 = vunpack.c.l.b16 %v319
    %v1105 = vunpack.c.h.b16 %v319
    %v1106 = vunpack.c.l.b16 %v320
    %v1107 = vunpack.c.h.b16 %v320
    %v1108 = vunpack.c.l.b16 %v321
    %v1109 = vunpack.c.h.b16 %v321
    %v1110 = vunpack.c.l.b16 %v322
    %v1111 = vunpack.c.h.b16 %v322
    %v1112 = vunpack.c.l.b16 %v323
    %v1113 = vunpack.c.h.b16 %v323
    %v1114 = vunpack.c.l.b16 %v324
    %v1115 = vunpack.c.h.b16 %v324
    %v1116 = vunpack.c.l.b16 %v325
    %v1117 = vunpack.c.h.b16 %v325
    %v1118 = vunpack.c.l.b16 %v326
    %v1119 = vunpack.c.h.b16 %v326
    %v1120 = vunpack.c.l.b16 %v327
    %v1121 = vunpack.c.h.b16 %v327
    %v1122 = vunpack.c.l.b16 %v328
    %v1123 = vunpack.c.h.b16 %v328
    %v1124 = vunpack.c.l.b16 %v329
    %v1125 = vunpack.c.h.b16 %v329
    %v1126 = vunpack.c.l.b16 %v330
    %v1127 = vunpack.c.h.b16 %v330
    %v1128 = vunpack.c.l.b16 %v331
    %v1129 = vunpack.c.h.b16 %v331
    %v1130 = vunpack.c.l.b16 %v332
    %v1131 = vunpack.c.h.b16 %v332
    %v1132 = vunpack.c.l.b16 %v333
    %v1133 = vunpack.c.h.b16 %v333
    %v1134 = vunpack.c.l.b16 %v334
    %v1135 = vunpack.c.h.b16 %v334
    %v1136 = vunpack.c.l.b16 %v335
    %v1137 = vunpack.c.h.b16 %v335
    %v1138 = vunpack.c.l.b16 %v336
    %v1139 = vunpack.c.h.b16 %v336
    %v1140 = vunpack.c.l.b16 %v337
    %v1141 = vunpack.c.h.b16 %v337
    %v1142 = vunpack.c.l.b16 %v338
    %v1143 = vunpack.c.h.b16 %v338
    %v1144 = vunpack.c.l.b16 %v339
    %v1145 = vunpack.c.h.b16 %v339
    %v1146 = vunpack.c.l.b16 %v340
    %v1147 = vunpack.c.h.b16 %v340
    %v1148 = vunpack.c.l.b16 %v341
    %v1149 = vunpack.c.h.b16 %v341
    %v1150 = vunpack.c.l.b16 %v342
    %v1151 = vunpack.c.h.b16 %v342
    %v1152 = vunpack.c.l.b16 %v343
    %v1153 = vunpack.c.h.b16 %v343
    %v1154 = vpack.c.b16 %v650, %v642
    %v1155 = vpack.c.b16 %v651, %v643
    %v1156 = vpack.c.b16 %v652, %v644
    %v1157 = vpack.c.b16 %v653, %v645
    %v1158 = vpack.c.b16 %v654, %v646
    %v1159 = vpack.c.b16 %v655, %v647
    %v1160 = vpack.c.b16 %v656, %v648
    %v1161 = vpack.c.b16 %v657, %v649
    %v1162 = vpack.c.b16 %v666, %v658
    %v1163 = vpack.c.b16 %v667, %v659
    %v1164 = vpack.c.b16 %v668, %v660
    %v1165 = vpack.c.b16 %v669, %v661
    %v1166 = vpack.c.b16 %v670, %v662
    %v1167 = vpack.c.b16 %v671, %v663
    %v1168 = vpack.c.b16 %v672, %v664
    %v1169 = vpack.c.b16 %v673, %v665
    %v1170 = vpack.c.b16 %v682, %v674
    %v1171 = vpack.c.b16 %v683, %v675
    %v1172 = vpack.c.b16 %v684, %v676
    %v1173 = vpack.c.b16 %v685, %v677
    %v1174 = vpack.c.b16 %v686, %v678
    %v1175 = vpack.c.b16 %v687, %v679
    %v1176 = vpack.c.b16 %v688, %v680
    %v1177 = vpack.c.b16 %v689, %v681
    %v1178 = vpack.c.b16 %v698, %v690
    %v1179 = vpack.c.b16 %v699, %v691
    %v1180 = vpack.c.b16 %v700, %v692
    %v1181 = vpack.c.b16 %v701, %v693
    %v1182 = vpack.c.b16 %v702, %v694
    %v1183 = vpack.c.b16 %v703, %v695
    %v1184 = vpack.c.b16 %v704, %v696
    %v1185 = vpack.c.b16 %v705, %v697
    %v1186 = vpack.c.b16 %v714, %v706
    %v1187 = vpack.c.b16 %v715, %v707
    %v1188 = vpack.c.b16 %v716, %v708
    %v1189 = vpack.c.b16 %v717, %v709
    %v1190 = vpack.c.b16 %v718, %v710
    %v1191 = vpack.c.b16 %v719, %v711
    %v1192 = vpack.c.b16 %v720, %v712
    %v1193 = vpack.c.b16 %v721, %v713
    %v1194 = vpack.c.b16 %v730, %v722
    %v1195 = vpack.c.b16 %v731, %v723
    %v1196 = vpack.c.b16 %v732, %v724
    %v1197 = vpack.c.b16 %v733, %v725
    %v1198 = vpack.c.b16 %v734, %v726
    %v1199 = vpack.c.b16 %v735, %v727
    %v1200 = vpack.c.b16 %v736, %v728
    %v1201 = vpack.c.b16 %v737, %v729
    %v1202 = vpack.c.b16 %v746, %v738
    %v1203 = vpack.c.b16 %v747, %v739
    %v1204 = vpack.c.b16 %v748, %v740
    %v1205 = vpack.c.b16 %v749, %v741
    %v1206 = vpack.c.b16 %v750, %v742
    %v1207 = vpack.c.b16 %v751, %v743
    %v1208 = vpack.c.b16 %v752, %v744
    %v1209 = vpack.c.b16 %v753, %v745
    %v1210 = vpack.c.b16 %v762, %v754
    %v1211 = vpack.c.b16 %v763, %v755
    %v1212 = vpack.c.b16 %v764, %v756
    %v1213 = vpack.c.b16 %v765, %v757
    %v1214 = vpack.c.b16 %v766, %v758
    %v1215 = vpack.c.b16 %v767, %v759
    %v1216 = vpack.c.b16 %v768, %v760
    %v1217 = vpack.c.b16 %v769, %v761
    %v1218 = vpack.c.b16 %v778, %v770
    %v1219 = vpack.c.b16 %v779, %v771
    %v1220 = vpack.c.b16 %v780, %v772
    %v1221 = vpack.c.b16 %v781, %v773
    %v1222 = vpack.c.b16 %v782, %v774
    %v1223 = vpack.c.b16 %v783, %v775
    %v1224 = vpack.c.b16 %v784, %v776
    %v1225 = vpack.c.b16 %v785, %v777
    %v1226 = vpack.c.b16 %v794, %v786
    %v1227 = vpack.c.b16 %v795, %v787
    %v1228 = vpack.c.b16 %v796, %v788
    %v1229 = vpack.c.b16 %v797, %v789
    %v1230 = vpack.c.b16 %v798, %v790
    %v1231 = vpack.c.b16 %v799, %v791
    %v1232 = vpack.c.b16 %v800, %v792
    %v1233 = vpack.c.b16 %v801, %v793
    %v1234 = vpack.c.b16 %v810, %v802
    %v1235 = vpack.c.b16 %v811, %v803
    %v1236 = vpack.c.b16 %v812, %v804
    %v1237 = vpack.c.b16 %v813, %v805
    %v1238 = vpack.c.b16 %v814, %v806
    %v1239 = vpack.c.b16 %v815, %v807
    %v1240 = vpack.c.b16 %v816, %v808
    %v1241 = vpack.c.b16 %v817, %v809
    %v1242 = vpack.c.b16 %v826, %v818
    %v1243 = vpack.c.b16 %v827, %v819
    %v1244 = vpack.c.b16 %v828, %v820
    %v1245 = vpack.c.b16 %v829, %v821
    %v1246 = vpack.c.b16 %v830, %v822
    %v1247 = vpack.c.b16 %v831, %v823
    %v1248 = vpack.c.b16 %v832, %v824
    %v1249 = vpack.c.b16 %v833, %v825
    %v1250 = vpack.c.b16 %v842, %v834
    %v1251 = vpack.c.b16 %v843, %v835
    %v1252 = vpack.c.b16 %v844, %v836
    %v1253 = vpack.c.b16 %v845, %v837
    %v1254 = vpack.c.b16 %v846, %v838
    %v1255 = vpack.c.b16 %v847, %v839
    %v1256 = vpack.c.b16 %v848, %v840
    %v1257 = vpack.c.b16 %v849, %v841
    %v1258 = vpack.c.b16 %v858, %v850
    %v1259 = vpack.c.b16 %v859, %v851
    %v1260 = vpack.c.b16 %v860, %v852
    %v1261 = vpack.c.b16 %v861, %v853
    %v1262 = vpack.c.b16 %v862, %v854
    %v1263 = vpack.c.b16 %v863, %v855
    %v1264 = vpack.c.b16 %v864, %v856
    %v1265 = vpack.c.b16 %v865, %v857
    %v1266 = vpack.c.b16 %v874, %v866
    %v1267 = vpack.c.b16 %v875, %v867
    %v1268 = vpack.c.b16 %v876, %v868
    %v1269 = vpack.c.b16 %v877, %v869
    %v1270 = vpack.c.b16 %v878, %v870
    %v1271 = vpack.c.b16 %v879, %v871
    %v1272 = vpack.c.b16 %v880, %v872
    %v1273 = vpack.c.b16 %v881, %v873
    %v1274 = vpack.c.b16 %v890, %v882
    %v1275 = vpack.c.b16 %v891, %v883
    %v1276 = vpack.c.b16 %v892, %v884
    %v1277 = vpack.c.b16 %v893, %v885
    %v1278 = vpack.c.b16 %v894, %v886
    %v1279 = vpack.c.b16 %v895, %v887
    %v1280 = vpack.c.b16 %v896, %v888
    %v1281 = vpack.c.b16 %v897, %v889
    %v1282 = vpack.c.b16 %v906, %v898
    %v1283 = vpack.c.b16 %v907, %v899
    %v1284 = vpack.c.b16 %v908, %v900
    %v1285 = vpack.c.b16 %v909, %v901
    %v1286 = vpack.c.b16 %v910, %v902
    %v1287 = vpack.c.b16 %v911, %v903
    %v1288 = vpack.c.b16 %v912, %v904
    %v1289 = vpack.c.b16 %v913, %v905
    %v1290 = vpack.c.b16 %v922, %v914
    %v1291 = vpack.c.b16 %v923, %v915
    %v1292 = vpack.c.b16 %v924, %v916
    %v1293 = vpack.c.b16 %v925, %v917
    %v1294 = vpack.c.b16 %v926, %v918
    %v1295 = vpack.c.b16 %v927, %v919
    %v1296 = vpack.c.b16 %v928, %v920
    %v1297 = vpack.c.b16 %v929, %v921
    %v1298 = vpack.c.b16 %v938, %v930
    %v1299 = vpack.c.b16 %v939, %v931
    %v1300 = vpack.c.b16 %v940, %v932
    %v1301 = vpack.c.b16 %v941, %v933
    %v1302 = vpack.c.b16 %v942, %v934
    %v1303 = vpack.c.b16 %v943, %v935
    %v1304 = vpack.c.b16 %v944, %v936
    %v1305 = vpack.c.b16 %v945, %v937
    %v1306 = vpack.c.b16 %v954, %v946
    %v1307 = vpack.c.b16 %v955, %v947
    %v1308 = vpack.c.b16 %v956, %v948
    %v1309 = vpack.c.b16 %v957, %v949
    %v1310 = vpack.c.b16 %v958, %v950
    %v1311 = vpack.c.b16 %v959, %v951
    %v1312 = vpack.c.b16 %v960, %v952
    %v1313 = vpack.c.b16 %v961, %v953
    %v1314 = vpack.c.b16 %v970, %v962
    %v1315 = vpack.c.b16 %v971, %v963
    %v1316 = vpack.c.b16 %v972, %v964
    %v1317 = vpack.c.b16 %v973, %v965
    %v1318 = vpack.c.b16 %v974, %v966
    %v1319 = vpack.c.b16 %v975, %v967
    %v1320 = vpack.c.b16 %v976, %v968
    %v1321 = vpack.c.b16 %v977, %v969
    %v1322 = vpack.c.b16 %v986, %v978
    %v1323 = vpack.c.b16 %v987, %v979
    %v1324 = vpack.c.b16 %v988, %v980
    %v1325 = vpack.c.b16 %v989, %v981
    %v1326 = vpack.c.b16 %v990, %v982
    %v1327 = vpack.c.b16 %v991, %v983
    %v1328 = vpack.c.b16 %v992, %v984
    %v1329 = vpack.c.b16 %v993, %v985
    %v1330 = vpack.c.b16 %v1002, %v994
    %v1331 = vpack.c.b16 %v1003, %v995
    %v1332 = vpack.c.b16 %v1004, %v996
    %v1333 = vpack.c.b16 %v1005, %v997
    %v1334 = vpack.c.b16 %v1006, %v998
    %v1335 = vpack.c.b16 %v1007, %v999
    %v1336 = vpack.c.b16 %v1008, %v1000
    %v1337 = vpack.c.b16 %v1009, %v1001
    %v1338 = vpack.c.b16 %v1018, %v1010
    %v1339 = vpack.c.b16 %v1019, %v1011
    %v1340 = vpack.c.b16 %v1020, %v1012
    %v1341 = vpack.c.b16 %v1021, %v1013
    %v1342 = vpack.c.b16 %v1022, %v1014
    %v1343 = vpack.c.b16 %v1023, %v1015
    %v1344 = vpack.c.b16 %v1024, %v1016
    %v1345 = vpack.c.b16 %v1025, %v1017
    %v1346 = vpack.c.b16 %v1034, %v1026
    %v1347 = vpack.c.b16 %v1035, %v1027
    %v1348 = vpack.c.b16 %v1036, %v1028
    %v1349 = vpack.c.b16 %v1037, %v1029
    %v1350 = vpack.c.b16 %v1038, %v1030
    %v1351 = vpack.c.b16 %v1039, %v1031
    %v1352 = vpack.c.b16 %v1040, %v1032
    %v1353 = vpack.c.b16 %v1041, %v1033
    %v1354 = vpack.c.b16 %v1050, %v1042
    %v1355 = vpack.c.b16 %v1051, %v1043
    %v1356 = vpack.c.b16 %v1052, %v1044
    %v1357 = vpack.c.b16 %v1053, %v1045
    %v1358 = vpack.c.b16 %v1054, %v1046
    %v1359 = vpack.c.b16 %v1055, %v1047
    %v1360 = vpack.c.b16 %v1056, %v1048
    %v1361 = vpack.c.b16 %v1057, %v1049
    %v1362 = vpack.c.b16 %v1066, %v1058
    %v1363 = vpack.c.b16 %v1067, %v1059
    %v1364 = vpack.c.b16 %v1068, %v1060
    %v1365 = vpack.c.b16 %v1069, %v1061
    %v1366 = vpack.c.b16 %v1070, %v1062
    %v1367 = vpack.c.b16 %v1071, %v1063
    %v1368 = vpack.c.b16 %v1072, %v1064
    %v1369 = vpack.c.b16 %v1073, %v1065
    %v1370 = vpack.c.b16 %v1082, %v1074
    %v1371 = vpack.c.b16 %v1083, %v1075
    %v1372 = vpack.c.b16 %v1084, %v1076
    %v1373 = vpack.c.b16 %v1085, %v1077
    %v1374 = vpack.c.b16 %v1086, %v1078
    %v1375 = vpack.c.b16 %v1087, %v1079
    %v1376 = vpack.c.b16 %v1088, %v1080
    %v1377 = vpack.c.b16 %v1089, %v1081
    %v1378 = vpack.c.b16 %v1098, %v1090
    %v1379 = vpack.c.b16 %v1099, %v1091
    %v1380 = vpack.c.b16 %v1100, %v1092
    %v1381 = vpack.c.b16 %v1101, %v1093
    %v1382 = vpack.c.b16 %v1102, %v1094
    %v1383 = vpack.c.b16 %v1103, %v1095
    %v1384 = vpack.c.b16 %v1104, %v1096
    %v1385 = vpack.c.b16 %v1105, %v1097
    %v1386 = vpack.c.b16 %v1114, %v1106
    %v1387 = vpack.c.b16 %v1115, %v1107
    %v1388 = vpack.c.b16 %v1116, %v1108
    %v1389 = vpack.c.b16 %v1117, %v1109
    %v1390 = vpack.c.b16 %v1118, %v1110
    %v1391 = vpack.c.b16 %v1119, %v1111
    %v1392 = vpack.c.b16 %v1120, %v1112
    %v1393 = vpack.c.b16 %v1121, %v1113
    %v1394 = vpack.c.b16 %v1130, %v1122
    %v1395 = vpack.c.b16 %v1131, %v1123
    %v1396 = vpack.c.b16 %v1132, %v1124
    %v1397 = vpack.c.b16 %v1133, %v1125
    %v1398 = vpack.c.b16 %v1134, %v1126
    %v1399 = vpack.c.b16 %v1135, %v1127
    %v1400 = vpack.c.b16 %v1136, %v1128
    %v1401 = vpack.c.b16 %v1137, %v1129
    %v1402 = vpack.c.b16 %v1146, %v1138
    %v1403 = vpack.c.b16 %v1147, %v1139
    %v1404 = vpack.c.b16 %v1148, %v1140
    %v1405 = vpack.c.b16 %v1149, %v1141
    %v1406 = vpack.c.b16 %v1150, %v1142
    %v1407 = vpack.c.b16 %v1151, %v1143
    %v1408 = vpack.c.b16 %v1152, %v1144
    %v1409 = vpack.c.b16 %v1153, %v1145
    %1666 = vmatprep.subr.bf16.mxu0 %v1211
    %1667 = vmatpush1.bf16.msra.mxu0 %v1210
    %1668 = vmatprep.subr.bf16.mxu0 %v1203
    %1669 = vmatpush1.bf16.msra.mxu0 %v1202
    %1670 = vmatprep.subr.bf16.mxu0 %v1195
    %1671 = vmatpush1.bf16.msra.mxu0 %v1194
    %1672 = vmatprep.subr.bf16.mxu0 %v1187
    %1673 = vmatpush1.bf16.msra.mxu0 %v1186
    %1674 = vmatprep.subr.bf16.mxu0 %v1179
    %1675 = vmatpush1.bf16.msra.mxu0 %v1178
    %1676 = vmatprep.subr.bf16.mxu0 %v1171
    %1677 = vmatpush1.bf16.msra.mxu0 %v1170
    %1678 = vmatprep.subr.bf16.mxu0 %v1163
    %1679 = vmatpush1.bf16.msra.mxu0 %v1162
    %1680 = vmatprep.subr.bf16.mxu0 %v1155
    %1681 = vmatpush1.bf16.msra.mxu0 %v1154
    %1682 = vmatprep.subr.bf16.mxu0 %v1275
    %1683 = vmatpush2.bf16.msra.mxu0 %v1274
    %1684 = vmatprep.subr.bf16.mxu0 %v1267
    %1685 = vmatpush2.bf16.msra.mxu0 %v1266
    %1686 = vmatprep.subr.bf16.mxu0 %v1259
    %1687 = vmatpush2.bf16.msra.mxu0 %v1258
    %1688 = vmatprep.subr.bf16.mxu0 %v1251
    %1689 = vmatpush2.bf16.msra.mxu0 %v1250
    %1690 = vmatprep.subr.bf16.mxu0 %v1243
    %1691 = vmatpush2.bf16.msra.mxu0 %v1242
    %1692 = vmatprep.subr.bf16.mxu0 %v1235
    %1693 = vmatpush2.bf16.msra.mxu0 %v1234
    %1694 = vmatprep.subr.bf16.mxu0 %v1227
    %1695 = vmatpush2.bf16.msra.mxu0 %v1226
    %1696 = vmatprep.subr.bf16.mxu0 %v1219
    %1697 = vmatpush2.bf16.msra.mxu0 %v1218
    %1698 = vmatprep.mubr.bf16.mxu0 %v85
    %1699 = vmatmul.mubr.bf16.gmra.mxu0 %v84
    %v1700 = vpop.f32.mrf.mxu0
    %v1701 = vadd.f32 %v349, %v1700
    %v1702 = vpop.f32.mrf.mxu0
    %v1703 = vadd.f32 %v353, %v1702
    %v1704 = vpop.f32.mrf.mxu0
    %v1705 = vpop.f32.mrf.mxu0
    %1706 = vdwg.mxu0
    %1707 = vmatprep.subr.bf16.mxu0 %v1339
    %1708 = vmatpush1.bf16.msra.mxu0 %v1338
    %1709 = vmatprep.subr.bf16.mxu0 %v1331
    %1710 = vmatpush1.bf16.msra.mxu0 %v1330
    %1711 = vmatprep.subr.bf16.mxu0 %v1323
    %1712 = vmatpush1.bf16.msra.mxu0 %v1322
    %1713 = vmatprep.subr.bf16.mxu0 %v1315
    %1714 = vmatpush1.bf16.msra.mxu0 %v1314
    %1715 = vmatprep.subr.bf16.mxu0 %v1307
    %1716 = vmatpush1.bf16.msra.mxu0 %v1306
    %1717 = vmatprep.subr.bf16.mxu0 %v1299
    %1718 = vmatpush1.bf16.msra.mxu0 %v1298
    %1719 = vmatprep.subr.bf16.mxu0 %v1291
    %1720 = vmatpush1.bf16.msra.mxu0 %v1290
    %1721 = vmatprep.subr.bf16.mxu0 %v1283
    %1722 = vmatpush1.bf16.msra.mxu0 %v1282
    %1723 = vmatprep.subr.bf16.mxu0 %v1403
    %1724 = vmatpush2.bf16.msra.mxu0 %v1402
    %1725 = vmatprep.subr.bf16.mxu0 %v1395
    %1726 = vmatpush2.bf16.msra.mxu0 %v1394
    %1727 = vmatprep.subr.bf16.mxu0 %v1387
    %1728 = vmatpush2.bf16.msra.mxu0 %v1386
    %1729 = vmatprep.subr.bf16.mxu0 %v1379
    %1730 = vmatpush2.bf16.msra.mxu0 %v1378
    %1731 = vmatprep.subr.bf16.mxu0 %v1371
    %1732 = vmatpush2.bf16.msra.mxu0 %v1370
    %1733 = vmatprep.subr.bf16.mxu0 %v1363
    %1734 = vmatpush2.bf16.msra.mxu0 %v1362
    %1735 = vmatprep.subr.bf16.mxu0 %v1355
    %1736 = vmatpush2.bf16.msra.mxu0 %v1354
    %1737 = vmatprep.subr.bf16.mxu0 %v1347
    %1738 = vmatpush2.bf16.msra.mxu0 %v1346
    %1739 = vmatprep.mubr.bf16.mxu0 %v87
    %1740 = vmatmul.mubr.bf16.gmra.mxu0 %v86
    %v1741 = vpop.f32.mrf.mxu0
    %v1742 = vadd.f32 %v1701, %v1741
    %v1743 = vpop.f32.mrf.mxu0
    %v1744 = vadd.f32 %v1703, %v1743
    %v1745 = vpop.f32.mrf.mxu0
    %v1746 = vpop.f32.mrf.mxu0
    %1747 = vdwg.mxu0
    %1748 = vmatprep.subr.bf16.mxu0 %v1213
    %1749 = vmatpush1.bf16.msra.mxu0 %v1212
    %1750 = vmatprep.subr.bf16.mxu0 %v1205
    %1751 = vmatpush1.bf16.msra.mxu0 %v1204
    %1752 = vmatprep.subr.bf16.mxu0 %v1197
    %1753 = vmatpush1.bf16.msra.mxu0 %v1196
    %1754 = vmatprep.subr.bf16.mxu0 %v1189
    %1755 = vmatpush1.bf16.msra.mxu0 %v1188
    %1756 = vmatprep.subr.bf16.mxu0 %v1181
    %1757 = vmatpush1.bf16.msra.mxu0 %v1180
    %1758 = vmatprep.subr.bf16.mxu0 %v1173
    %1759 = vmatpush1.bf16.msra.mxu0 %v1172
    %1760 = vmatprep.subr.bf16.mxu0 %v1165
    %1761 = vmatpush1.bf16.msra.mxu0 %v1164
    %1762 = vmatprep.subr.bf16.mxu0 %v1157
    %1763 = vmatpush1.bf16.msra.mxu0 %v1156
    %1764 = vmatprep.subr.bf16.mxu0 %v1277
    %1765 = vmatpush2.bf16.msra.mxu0 %v1276
    %1766 = vmatprep.subr.bf16.mxu0 %v1269
    %1767 = vmatpush2.bf16.msra.mxu0 %v1268
    %1768 = vmatprep.subr.bf16.mxu0 %v1261
    %1769 = vmatpush2.bf16.msra.mxu0 %v1260
    %1770 = vmatprep.subr.bf16.mxu0 %v1253
    %1771 = vmatpush2.bf16.msra.mxu0 %v1252
    %1772 = vmatprep.subr.bf16.mxu0 %v1245
    %1773 = vmatpush2.bf16.msra.mxu0 %v1244
    %1774 = vmatprep.subr.bf16.mxu0 %v1237
    %1775 = vmatpush2.bf16.msra.mxu0 %v1236
    %1776 = vmatprep.subr.bf16.mxu0 %v1229
    %1777 = vmatpush2.bf16.msra.mxu0 %v1228
    %1778 = vmatprep.subr.bf16.mxu0 %v1221
    %1779 = vmatpush2.bf16.msra.mxu0 %v1220
    %1780 = vmatprep.mubr.bf16.mxu0 %v85
    %1781 = vmatmul.mubr.bf16.gmra.mxu0 %v84
    %v1782 = vpop.f32.mrf.mxu0
    %v1783 = vadd.f32 %v357, %v1782
    %v1784 = vpop.f32.mrf.mxu0
    %v1785 = vadd.f32 %v361, %v1784
    %v1786 = vpop.f32.mrf.mxu0
    %v1787 = vpop.f32.mrf.mxu0
    %1788 = vdwg.mxu0
    %1789 = vmatprep.subr.bf16.mxu0 %v1341
    %1790 = vmatpush1.bf16.msra.mxu0 %v1340
    %1791 = vmatprep.subr.bf16.mxu0 %v1333
    %1792 = vmatpush1.bf16.msra.mxu0 %v1332
    %1793 = vmatprep.subr.bf16.mxu0 %v1325
    %1794 = vmatpush1.bf16.msra.mxu0 %v1324
    %1795 = vmatprep.subr.bf16.mxu0 %v1317
    %1796 = vmatpush1.bf16.msra.mxu0 %v1316
    %1797 = vmatprep.subr.bf16.mxu0 %v1309
    %1798 = vmatpush1.bf16.msra.mxu0 %v1308
    %1799 = vmatprep.subr.bf16.mxu0 %v1301
    %1800 = vmatpush1.bf16.msra.mxu0 %v1300
    %1801 = vmatprep.subr.bf16.mxu0 %v1293
    %1802 = vmatpush1.bf16.msra.mxu0 %v1292
    %1803 = vmatprep.subr.bf16.mxu0 %v1285
    %1804 = vmatpush1.bf16.msra.mxu0 %v1284
    %1805 = vmatprep.subr.bf16.mxu0 %v1405
    %1806 = vmatpush2.bf16.msra.mxu0 %v1404
    %1807 = vmatprep.subr.bf16.mxu0 %v1397
    %1808 = vmatpush2.bf16.msra.mxu0 %v1396
    %1809 = vmatprep.subr.bf16.mxu0 %v1389
    %1810 = vmatpush2.bf16.msra.mxu0 %v1388
    %1811 = vmatprep.subr.bf16.mxu0 %v1381
    %1812 = vmatpush2.bf16.msra.mxu0 %v1380
    %1813 = vmatprep.subr.bf16.mxu0 %v1373
    %1814 = vmatpush2.bf16.msra.mxu0 %v1372
    %1815 = vmatprep.subr.bf16.mxu0 %v1365
    %1816 = vmatpush2.bf16.msra.mxu0 %v1364
    %1817 = vmatprep.subr.bf16.mxu0 %v1357
    %1818 = vmatpush2.bf16.msra.mxu0 %v1356
    %1819 = vmatprep.subr.bf16.mxu0 %v1349
    %1820 = vmatpush2.bf16.msra.mxu0 %v1348
    %1821 = vmatprep.mubr.bf16.mxu0 %v87
    %1822 = vmatmul.mubr.bf16.gmra.mxu0 %v86
    %v1823 = vpop.f32.mrf.mxu0
    %v1824 = vadd.f32 %v1783, %v1823
    %v1825 = vpop.f32.mrf.mxu0
    %v1826 = vadd.f32 %v1785, %v1825
    %v1827 = vpop.f32.mrf.mxu0
    %v1828 = vpop.f32.mrf.mxu0
    %1829 = vdwg.mxu0
    %1830 = vmatprep.subr.bf16.mxu0 %v1215
    %1831 = vmatpush1.bf16.msra.mxu0 %v1214
    %1832 = vmatprep.subr.bf16.mxu0 %v1207
    %1833 = vmatpush1.bf16.msra.mxu0 %v1206
    %1834 = vmatprep.subr.bf16.mxu0 %v1199
    %1835 = vmatpush1.bf16.msra.mxu0 %v1198
    %1836 = vmatprep.subr.bf16.mxu0 %v1191
    %1837 = vmatpush1.bf16.msra.mxu0 %v1190
    %1838 = vmatprep.subr.bf16.mxu0 %v1183
    %1839 = vmatpush1.bf16.msra.mxu0 %v1182
    %1840 = vmatprep.subr.bf16.mxu0 %v1175
    %1841 = vmatpush1.bf16.msra.mxu0 %v1174
    %1842 = vmatprep.subr.bf16.mxu0 %v1167
    %1843 = vmatpush1.bf16.msra.mxu0 %v1166
    %1844 = vmatprep.subr.bf16.mxu0 %v1159
    %1845 = vmatpush1.bf16.msra.mxu0 %v1158
    %1846 = vmatprep.subr.bf16.mxu0 %v1279
    %1847 = vmatpush2.bf16.msra.mxu0 %v1278
    %1848 = vmatprep.subr.bf16.mxu0 %v1271
    %1849 = vmatpush2.bf16.msra.mxu0 %v1270
    %1850 = vmatprep.subr.bf16.mxu0 %v1263
    %1851 = vmatpush2.bf16.msra.mxu0 %v1262
    %1852 = vmatprep.subr.bf16.mxu0 %v1255
    %1853 = vmatpush2.bf16.msra.mxu0 %v1254
    %1854 = vmatprep.subr.bf16.mxu0 %v1247
    %1855 = vmatpush2.bf16.msra.mxu0 %v1246
    %1856 = vmatprep.subr.bf16.mxu0 %v1239
    %1857 = vmatpush2.bf16.msra.mxu0 %v1238
    %1858 = vmatprep.subr.bf16.mxu0 %v1231
    %1859 = vmatpush2.bf16.msra.mxu0 %v1230
    %1860 = vmatprep.subr.bf16.mxu0 %v1223
    %1861 = vmatpush2.bf16.msra.mxu0 %v1222
    %1862 = vmatprep.mubr.bf16.mxu0 %v85
    %1863 = vmatmul.mubr.bf16.gmra.mxu0 %v84
    %v1864 = vpop.f32.mrf.mxu0
    %v1865 = vadd.f32 %v365, %v1864
    %v1866 = vpop.f32.mrf.mxu0
    %v1867 = vadd.f32 %v369, %v1866
    %v1868 = vpop.f32.mrf.mxu0
    %v1869 = vpop.f32.mrf.mxu0
    %1870 = vdwg.mxu0
    %1871 = vmatprep.subr.bf16.mxu0 %v1343
    %1872 = vmatpush1.bf16.msra.mxu0 %v1342
    %1873 = vmatprep.subr.bf16.mxu0 %v1335
    %1874 = vmatpush1.bf16.msra.mxu0 %v1334
    %1875 = vmatprep.subr.bf16.mxu0 %v1327
    %1876 = vmatpush1.bf16.msra.mxu0 %v1326
    %1877 = vmatprep.subr.bf16.mxu0 %v1319
    %1878 = vmatpush1.bf16.msra.mxu0 %v1318
    %1879 = vmatprep.subr.bf16.mxu0 %v1311
    %1880 = vmatpush1.bf16.msra.mxu0 %v1310
    %1881 = vmatprep.subr.bf16.mxu0 %v1303
    %1882 = vmatpush1.bf16.msra.mxu0 %v1302
    %1883 = vmatprep.subr.bf16.mxu0 %v1295
    %1884 = vmatpush1.bf16.msra.mxu0 %v1294
    %1885 = vmatprep.subr.bf16.mxu0 %v1287
    %1886 = vmatpush1.bf16.msra.mxu0 %v1286
    %1887 = vmatprep.subr.bf16.mxu0 %v1407
    %1888 = vmatpush2.bf16.msra.mxu0 %v1406
    %1889 = vmatprep.subr.bf16.mxu0 %v1399
    %1890 = vmatpush2.bf16.msra.mxu0 %v1398
    %1891 = vmatprep.subr.bf16.mxu0 %v1391
    %1892 = vmatpush2.bf16.msra.mxu0 %v1390
    %1893 = vmatprep.subr.bf16.mxu0 %v1383
    %1894 = vmatpush2.bf16.msra.mxu0 %v1382
    %1895 = vmatprep.subr.bf16.mxu0 %v1375
    %1896 = vmatpush2.bf16.msra.mxu0 %v1374
    %1897 = vmatprep.subr.bf16.mxu0 %v1367
    %1898 = vmatpush2.bf16.msra.mxu0 %v1366
    %1899 = vmatprep.subr.bf16.mxu0 %v1359
    %1900 = vmatpush2.bf16.msra.mxu0 %v1358
    %1901 = vmatprep.subr.bf16.mxu0 %v1351
    %1902 = vmatpush2.bf16.msra.mxu0 %v1350
    %1903 = vmatprep.mubr.bf16.mxu0 %v87
    %1904 = vmatmul.mubr.bf16.gmra.mxu0 %v86
    %v1905 = vpop.f32.mrf.mxu0
    %v1906 = vadd.f32 %v1865, %v1905
    %v1907 = vpop.f32.mrf.mxu0
    %v1908 = vadd.f32 %v1867, %v1907
    %v1909 = vpop.f32.mrf.mxu0
    %v1910 = vpop.f32.mrf.mxu0
    %1911 = vdwg.mxu0
    %1912 = vmatprep.subr.bf16.mxu0 %v1217
    %1913 = vmatpush1.bf16.msra.mxu0 %v1216
    %1914 = vmatprep.subr.bf16.mxu0 %v1209
    %1915 = vmatpush1.bf16.msra.mxu0 %v1208
    %1916 = vmatprep.subr.bf16.mxu0 %v1201
    %1917 = vmatpush1.bf16.msra.mxu0 %v1200
    %1918 = vmatprep.subr.bf16.mxu0 %v1193
    %1919 = vmatpush1.bf16.msra.mxu0 %v1192
    %1920 = vmatprep.subr.bf16.mxu0 %v1185
    %1921 = vmatpush1.bf16.msra.mxu0 %v1184
    %1922 = vmatprep.subr.bf16.mxu0 %v1177
    %1923 = vmatpush1.bf16.msra.mxu0 %v1176
    %1924 = vmatprep.subr.bf16.mxu0 %v1169
    %1925 = vmatpush1.bf16.msra.mxu0 %v1168
    %1926 = vmatprep.subr.bf16.mxu0 %v1161
    %1927 = vmatpush1.bf16.msra.mxu0 %v1160
    %1928 = vmatprep.subr.bf16.mxu0 %v1281
    %1929 = vmatpush2.bf16.msra.mxu0 %v1280
    %1930 = vmatprep.subr.bf16.mxu0 %v1273
    %1931 = vmatpush2.bf16.msra.mxu0 %v1272
    %1932 = vmatprep.subr.bf16.mxu0 %v1265
    %1933 = vmatpush2.bf16.msra.mxu0 %v1264
    %1934 = vmatprep.subr.bf16.mxu0 %v1257
    %1935 = vmatpush2.bf16.msra.mxu0 %v1256
    %1936 = vmatprep.subr.bf16.mxu0 %v1249
    %1937 = vmatpush2.bf16.msra.mxu0 %v1248
    %1938 = vmatprep.subr.bf16.mxu0 %v1241
    %1939 = vmatpush2.bf16.msra.mxu0 %v1240
    %1940 = vmatprep.subr.bf16.mxu0 %v1233
    %1941 = vmatpush2.bf16.msra.mxu0 %v1232
    %1942 = vmatprep.subr.bf16.mxu0 %v1225
    %1943 = vmatpush2.bf16.msra.mxu0 %v1224
    %1944 = vmatprep.mubr.bf16.mxu0 %v85
    %1945 = vmatmul.mubr.bf16.gmra.mxu0 %v84
    %v1946 = vpop.f32.mrf.mxu0
    %v1947 = vadd.f32 %v373, %v1946
    %v1948 = vpop.f32.mrf.mxu0
    %v1949 = vadd.f32 %v377, %v1948
    %v1950 = vpop.f32.mrf.mxu0
    %v1951 = vpop.f32.mrf.mxu0
    %1952 = vdwg.mxu0
    %1953 = vmatprep.subr.bf16.mxu0 %v1345
    %1954 = vmatpush1.bf16.msra.mxu0 %v1344
    %1955 = vmatprep.subr.bf16.mxu0 %v1337
    %1956 = vmatpush1.bf16.msra.mxu0 %v1336
    %1957 = vmatprep.subr.bf16.mxu0 %v1329
    %1958 = vmatpush1.bf16.msra.mxu0 %v1328
    %1959 = vmatprep.subr.bf16.mxu0 %v1321
    %1960 = vmatpush1.bf16.msra.mxu0 %v1320
    %1961 = vmatprep.subr.bf16.mxu0 %v1313
    %1962 = vmatpush1.bf16.msra.mxu0 %v1312
    %1963 = vmatprep.subr.bf16.mxu0 %v1305
    %1964 = vmatpush1.bf16.msra.mxu0 %v1304
    %1965 = vmatprep.subr.bf16.mxu0 %v1297
    %1966 = vmatpush1.bf16.msra.mxu0 %v1296
    %1967 = vmatprep.subr.bf16.mxu0 %v1289
    %1968 = vmatpush1.bf16.msra.mxu0 %v1288
    %1969 = vmatprep.subr.bf16.mxu0 %v1409
    %1970 = vmatpush2.bf16.msra.mxu0 %v1408
    %1971 = vmatprep.subr.bf16.mxu0 %v1401
    %1972 = vmatpush2.bf16.msra.mxu0 %v1400
    %1973 = vmatprep.subr.bf16.mxu0 %v1393
    %1974 = vmatpush2.bf16.msra.mxu0 %v1392
    %1975 = vmatprep.subr.bf16.mxu0 %v1385
    %1976 = vmatpush2.bf16.msra.mxu0 %v1384
    %1977 = vmatprep.subr.bf16.mxu0 %v1377
    %1978 = vmatpush2.bf16.msra.mxu0 %v1376
    %1979 = vmatprep.subr.bf16.mxu0 %v1369
    %1980 = vmatpush2.bf16.msra.mxu0 %v1368
    %1981 = vmatprep.subr.bf16.mxu0 %v1361
    %1982 = vmatpush2.bf16.msra.mxu0 %v1360
    %1983 = vmatprep.subr.bf16.mxu0 %v1353
    %1984 = vmatpush2.bf16.msra.mxu0 %v1352
    %1985 = vmatprep.mubr.bf16.mxu0 %v87
    %1986 = vmatmul.mubr.bf16.gmra.mxu0 %v86
    %v1987 = vpop.f32.mrf.mxu0
    %v1988 = vadd.f32 %v1947, %v1987
    %v1989 = vpop.f32.mrf.mxu0
    %v1990 = vadd.f32 %v1949, %v1989
    %v1991 = vpop.f32.mrf.mxu0
    %v1992 = vpop.f32.mrf.mxu0
    %1993 = vdwg.mxu0
    %v1994 = vmax.f32 %v1742, 0.0
    %v1995 = vmax.f32 %v1744, 0.0
    %v1996 = vmax.f32 %v1824, 0.0
    %v1997 = vmax.f32 %v1826, 0.0
    %v1998 = vmax.f32 %v1906, 0.0
    %v1999 = vmax.f32 %v1908, 0.0
    %v2000 = vmax.f32 %v1988, 0.0
    %v2001 = vmax.f32 %v1990, 0.0
    %s2002 = scalar_lea.vmem %s2, 1
    %v2003 = vld [vmem:[%s2002] ss:$2 sm:$0xff]
    %v2005 = vlaneseq
    %v2006 = vshrl.u32 %v2005, 7
    %v2007 = vsub.s32 0, %v2006
    %v2008 = vrot.slane %v2003, %v2007
    %v2009 = vlaneseq
    %v2010 = vshrl.u32 %v2009, 7
    %v2011 = vsub.s32 1, %v2010
    %v2012 = vrot.slane %v2003, %v2011
    %v2013 = vlaneseq
    %v2014 = vshrl.u32 %v2013, 7
    %v2015 = vsub.s32 2, %v2014
    %v2016 = vrot.slane %v2003, %v2015
    %v2017 = vlaneseq
    %v2018 = vshrl.u32 %v2017, 7
    %v2019 = vsub.s32 3, %v2018
    %v2020 = vrot.slane %v2003, %v2019
    %v2021 = vlaneseq
    %v2022 = vshrl.u32 %v2021, 7
    %v2023 = vsub.s32 4, %v2022
    %v2024 = vrot.slane %v2003, %v2023
    %v2025 = vlaneseq
    %v2026 = vshrl.u32 %v2025, 7
    %v2027 = vsub.s32 5, %v2026
    %v2028 = vrot.slane %v2003, %v2027
    %v2029 = vlaneseq
    %v2030 = vshrl.u32 %v2029, 7
    %v2031 = vsub.s32 6, %v2030
    %v2032 = vrot.slane %v2003, %v2031
    %v2033 = vlaneseq
    %v2034 = vshrl.u32 %v2033, 7
    %v2035 = vsub.s32 7, %v2034
    %v2036 = vrot.slane %v2003, %v2035
    %v2045 = vmul.f32 %v1994, %v2008
    %v2046 = vmul.f32 %v1995, %v2012
    %v2047 = vmul.f32 %v1996, %v2016
    %v2048 = vmul.f32 %v1997, %v2020
    %v2049 = vmul.f32 %v1998, %v2024
    %v2050 = vmul.f32 %v1999, %v2028
    %v2051 = vmul.f32 %v2000, %v2032
    %v2052 = vmul.f32 %v2001, %v2036
    %v2053 = vadd.f32 %v2045, %v2046
    %v2054 = vadd.f32 %v2053, %v2047
    %v2055 = vadd.f32 %v2054, %v2048
    %v2056 = vadd.f32 %v2055, %v2049
    %v2057 = vadd.f32 %v2056, %v2050
    %v2058 = vadd.f32 %v2057, %v2051
    %v2059 = vadd.f32 %v2058, %v2052
    %v2060 = vpack.c.bf16 %v2059, %v2059
    %v2061 = vld [vmem:[#allocation5] sm:$0xff]
    %v2062 = vld [vmem:[#allocation5 + $0x8] sm:$0xff]
    %v2063 = vld [vmem:[#allocation5 + $0x10] sm:$0xff]
    %v2064 = vld [vmem:[#allocation5 + $0x18] sm:$0xff]
    %v2065 = vld [vmem:[#allocation5 + $0x20] sm:$0xff]
    %v2066 = vld [vmem:[#allocation5 + $0x28] sm:$0xff]
    %v2067 = vld [vmem:[#allocation5 + $0x30] sm:$0xff]
    %v2068 = vld [vmem:[#allocation5 + $0x38] sm:$0xff]
    %v2069 = vld [vmem:[#allocation5 + $0x40] sm:$0xff]
    %v2070 = vld [vmem:[#allocation5 + $0x48] sm:$0xff]
    %v2071 = vld [vmem:[#allocation5 + $0x50] sm:$0xff]
    %v2072 = vld [vmem:[#allocation5 + $0x58] sm:$0xff]
    %v2073 = vld [vmem:[#allocation5 + $0x60] sm:$0xff]
    %v2074 = vld [vmem:[#allocation5 + $0x68] sm:$0xff]
    %v2075 = vld [vmem:[#allocation5 + $0x70] sm:$0xff]
    %v2076 = vld [vmem:[#allocation5 + $0x78] sm:$0xff]
    %v2077 = vld [vmem:[#allocation7] ss:$4 sm:$0x3]
    %v2079 = vlaneseq
    %v2080 = vshrl.u32 %v2079, 7
    %v2081 = vsub.s32 0, %v2080
    %v2082 = vrot.slane %v2077, %v2081
    %v2083 = vlaneseq
    %v2084 = vshrl.u32 %v2083, 7
    %v2085 = vsub.s32 1, %v2084
    %v2086 = vrot.slane %v2077, %v2085
    %v2105 = vunpack.c.l.b16 %v2061
    %v2106 = vunpack.c.h.b16 %v2061
    %v2107 = vunpack.c.l.b16 %v2062
    %v2108 = vunpack.c.h.b16 %v2062
    %v2109 = vunpack.c.l.b16 %v2063
    %v2110 = vunpack.c.h.b16 %v2063
    %v2111 = vunpack.c.l.b16 %v2064
    %v2112 = vunpack.c.h.b16 %v2064
    %v2113 = vunpack.c.l.b16 %v2065
    %v2114 = vunpack.c.h.b16 %v2065
    %v2115 = vunpack.c.l.b16 %v2066
    %v2116 = vunpack.c.h.b16 %v2066
    %v2117 = vunpack.c.l.b16 %v2067
    %v2118 = vunpack.c.h.b16 %v2067
    %v2119 = vunpack.c.l.b16 %v2068
    %v2120 = vunpack.c.h.b16 %v2068
    %v2121 = vunpack.c.l.b16 %v2069
    %v2122 = vunpack.c.h.b16 %v2069
    %v2123 = vunpack.c.l.b16 %v2070
    %v2124 = vunpack.c.h.b16 %v2070
    %v2125 = vunpack.c.l.b16 %v2071
    %v2126 = vunpack.c.h.b16 %v2071
    %v2127 = vunpack.c.l.b16 %v2072
    %v2128 = vunpack.c.h.b16 %v2072
    %v2129 = vunpack.c.l.b16 %v2073
    %v2130 = vunpack.c.h.b16 %v2073
    %v2131 = vunpack.c.l.b16 %v2074
    %v2132 = vunpack.c.h.b16 %v2074
    %v2133 = vunpack.c.l.b16 %v2075
    %v2134 = vunpack.c.h.b16 %v2075
    %v2135 = vunpack.c.l.b16 %v2076
    %v2136 = vunpack.c.h.b16 %v2076
    %v2137 = vpack.c.b16 %v2107, %v2105
    %v2138 = vpack.c.b16 %v2108, %v2106
    %v2139 = vpack.c.b16 %v2111, %v2109
    %v2140 = vpack.c.b16 %v2112, %v2110
    %v2141 = vpack.c.b16 %v2115, %v2113
    %v2142 = vpack.c.b16 %v2116, %v2114
    %v2143 = vpack.c.b16 %v2119, %v2117
    %v2144 = vpack.c.b16 %v2120, %v2118
    %v2145 = vpack.c.b16 %v2123, %v2121
    %v2146 = vpack.c.b16 %v2124, %v2122
    %v2147 = vpack.c.b16 %v2127, %v2125
    %v2148 = vpack.c.b16 %v2128, %v2126
    %v2149 = vpack.c.b16 %v2131, %v2129
    %v2150 = vpack.c.b16 %v2132, %v2130
    %v2151 = vpack.c.b16 %v2135, %v2133
    %v2152 = vpack.c.b16 %v2136, %v2134
    %2169 = vmatprep.subr.bf16.mxu0 %v2152
    %2170 = vmatpush1.bf16.msra.mxu0 %v2151
    %2171 = vmatprep.subr.bf16.mxu0 %v2150
    %2172 = vmatpush1.bf16.msra.mxu0 %v2149
    %2173 = vmatprep.subr.bf16.mxu0 %v2148
    %2174 = vmatpush1.bf16.msra.mxu0 %v2147
    %2175 = vmatprep.subr.bf16.mxu0 %v2146
    %2176 = vmatpush1.bf16.msra.mxu0 %v2145
    %2177 = vmatprep.subr.bf16.mxu0 %v2144
    %2178 = vmatpush1.bf16.msra.mxu0 %v2143
    %2179 = vmatprep.subr.bf16.mxu0 %v2142
    %2180 = vmatpush1.bf16.msra.mxu0 %v2141
    %2181 = vmatprep.subr.bf16.mxu0 %v2140
    %2182 = vmatpush1.bf16.msra.mxu0 %v2139
    %2183 = vmatprep.subr.bf16.mxu0 %v2138
    %2184 = vmatpush1.bf16.msra.mxu0 %v2137
    %2185 = vmatprep.subr.bf16.mxu0 0
    %2186 = vmatpush2.bf16.msra.mxu0 0
    %2187 = vmatprep.subr.bf16.mxu0 0
    %2188 = vmatpush2.bf16.msra.mxu0 0
    %2189 = vmatprep.subr.bf16.mxu0 0
    %2190 = vmatpush2.bf16.msra.mxu0 0
    %2191 = vmatprep.subr.bf16.mxu0 0
    %2192 = vmatpush2.bf16.msra.mxu0 0
    %2193 = vmatprep.subr.bf16.mxu0 0
    %2194 = vmatpush2.bf16.msra.mxu0 0
    %2195 = vmatprep.subr.bf16.mxu0 0
    %2196 = vmatpush2.bf16.msra.mxu0 0
    %2197 = vmatprep.subr.bf16.mxu0 0
    %2198 = vmatpush2.bf16.msra.mxu0 0
    %2199 = vmatprep.subr.bf16.mxu0 0
    %2200 = vmatpush2.bf16.msra.mxu0 0
    %2201 = vmatprep.mubr.bf16.mxu0 0
    %2202 = vmatmul.mubr.bf16.gmra.mxu0 %v2060
    %v2203 = vpop.f32.mrf.mxu0
    %v2204 = vadd.f32 %v2082, %v2203
    %v2205 = vpop.f32.mrf.mxu0
    %v2206 = vadd.f32 %v2086, %v2205
    %v2207 = vpop.f32.mrf.mxu0
    %v2208 = vpop.f32.mrf.mxu0
    %2209 = vdwg.mxu0
    %v2210 = vmax.f32 %v2204, 0.0
    %v2211 = vmax.f32 %v2206, 0.0
    %s2212 = scalar_lea.vmem [#allocation7], 1
    %v2213 = vld [vmem:[%s2212] ss:$4 sm:$0x3]
    %v2215 = vlaneseq
    %v2216 = vshrl.u32 %v2215, 7
    %v2217 = vsub.s32 0, %v2216
    %v2218 = vrot.slane %v2213, %v2217
    %v2219 = vlaneseq
    %v2220 = vshrl.u32 %v2219, 7
    %v2221 = vsub.s32 1, %v2220
    %v2222 = vrot.slane %v2213, %v2221
    %v2225 = vmul.f32 %v2210, %v2218
    %v2226 = vmul.f32 %v2211, %v2222
    %vm2227 = vcmask 1041408
    %v2228 = vsel %vm2227, %v2225, 0.0
    %v2229 = vsel %vm2227, %v2226, 0.0
    %v2230 = vadd.f32 %v2228, %v2229
    %2231 = vadd.xlane.f32.xlu0 %v2230
    %v2232 = vpop.xlane.xlu0 %2231
    %v2233 = vld [vmem:[#allocation7 + $0x2] sm:$0x1]
    %v2234 = vlaneseq
    %v2235 = vshrl.u32 %v2234, 7
    %v2236 = vsub.s32 0, %v2235
    %v2237 = vrot.slane %v2233, %v2236
    %v2238 = vadd.f32 %v2232, %v2237
    %2240 = vset.pattern.permute.xlu0 0
    %2241 = vperm.xlu0 %2240, %v2238
    %v2242 = vpop.permute.xlu0 %2241
    %v2243 = vlaneseq
    %v2244 = vand.u32 %v2243, 127
    %v2245 = vlaneseq
    %v2246 = vshrl.u32 %v2245, 7
    %v2247 = vsub.s32 %v2244, %v2246
    %v2248 = vrot.slane %v2242, %v2247
    %vm2250 = vcmask 8192
    %2251 = vst.msk [vmem:[#allocation8] sm:$0x1] %vm2250, %v2248
    // Predicated region
    $region34: #{model_forward.1} parent=1 // pred_check
      _
    $region35: #{model_forward.1} parent=1 // pred_check_branch
      %2253 = sbr.rel (0) target = $region37
    $region36: #{model_forward.1} parent=1 // pred_region
      %s2255 = ssub.s32 16, 16
      %2256 = vsyncadd [#allocation4], %s2255
      %s2258 = sshll.u32 [#allocation8], 4
      %s2259 = int_to_ptr.vmem [resolvable:$true] %s2258
      %2261 = dma.vmem_to_hbm [thread:$0]  %s2259, 16, %s5, [#allocation4]
    $region37: #{model_forward.1} parent=1 // pred_fallthru
      _
    // Predicated region
    $region38: #{model_forward.1} parent=1 // pred_check
      _
    $region39: #{model_forward.1} parent=1 // pred_check_branch
      %2263 = sbr.rel (0) target = $region41
    $region40: #{model_forward.1} parent=1 // pred_region
      %2264 = dma.done [#allocation4], 16
    $region41: #{model_forward.1} parent=1 // pred_fallthru
      _
    %2265 = vsyncpa [#allocation3], 1
    %2266 = vsyncpa [#allocation6], 1
    %2267 = vsyncpa [#allocation4], 1

</llo_original>
